<compile_context>
chip_gen: v7x
topology: tpu7x:2x2x1
jax: 0.10.0
libtpu: 0.0.40
codegen_flags: <defaults>
</compile_context>

<pallas_src>
import numpy as np
import jax
import jax.numpy as jnp
from jax import lax
from jax.experimental import pallas as pl
from jax.experimental.pallas import tpu as pltpu


# -----------------------------------------------------------------------------
# SRM fixed filters (identical to the PyTorch _build_kernel)
# -----------------------------------------------------------------------------
_F1 = np.asarray([[0, 0, 0, 0, 0],
                  [0, -1, 2, -1, 0],
                  [0, 2, -4, 2, 0],
                  [0, -1, 2, -1, 0],
                  [0, 0, 0, 0, 0]], dtype=np.float64) / 4.0
_F2 = np.asarray([[-1, 2, -2, 2, -1],
                  [2, -6, 8, -6, 2],
                  [-2, 8, -12, 8, -2],
                  [2, -6, 8, -6, 2],
                  [-1, 2, -2, 2, -1]], dtype=np.float64) / 12.0
_F3 = np.asarray([[0, 0, 0, 0, 0],
                  [0, 0, 0, 0, 0],
                  [0, 1, -2, 1, 0],
                  [0, 0, 0, 0, 0],
                  [0, 0, 0, 0, 0]], dtype=np.float64) / 2.0


def _nonzero_taps(f):
    """Compile-time (dh, dw, coeff) list, zero taps skipped."""
    return tuple((dh, dw, float(f[dh, dw]))
                 for dh in range(5) for dw in range(5) if f[dh, dw] != 0.0)


# Filter-major order (f1, f2, f3): matches np.repeat(filters, inc, axis=0).
_FILTER_TAPS = (_nonzero_taps(_F1), _nonzero_taps(_F2), _nonzero_taps(_F3))


def build_srm_kernel(inc):
    """(3*inc, 1, 5, 5) float32 SRM filter bank, identical to PyTorch."""
    filters = np.array([[_F1], [_F2], [_F3]])          # (3, 1, 5, 5)
    filters = np.repeat(filters, inc, axis=0)           # (3*inc, 1, 5, 5)
    return filters.astype(np.float32)


# -----------------------------------------------------------------------------
# Pallas kernel: fused 5x5 SRM conv (3 filters, constant taps) + hardtanh
#                + 1x1 matmul with folded BN + ReLU, one image per grid step.
# -----------------------------------------------------------------------------
def srm_fused_kernel(xp_ref, w1_ref, b_ref, o_ref):
    # xp_ref: (1, inc, H+4, W+4)  zero-padded NCHW input (one image)
    # w1_ref: (outc, 3*inc)       BN-folded 1x1 weight, filter-major columns
    # b_ref : (outc, 1)           BN-folded bias
    # o_ref : (1, outc, H*W)      lane-dense output (reshaped to NCHW outside)
    inc = xp_ref.shape[1]
    H = xp_ref.shape[2] - 4
    W = xp_ref.shape[3] - 4

    x = xp_ref[0]                                        # (inc, H+4, W+4)

    # 5x5 SRM conv with compile-time constant coefficients (zero taps skipped),
    # one accumulator per filter over all inc channels at once (VPU).
    accs = []
    for taps in _FILTER_TAPS:                            # filter-major: f1,f2,f3
        acc = None
        for dh, dw, coef in taps:
            t = x[:, dh:dh + H, dw:dw + W] * coef        # (inc, H, W)
            acc = t if acc is None else acc + t
        accs.append(jnp.clip(acc, -3.0, 3.0))            # Hardtanh(-3, 3)

    # Rows ordered j = k*inc + c (filter k, input channel c); H*W on lanes.
    acc = jnp.concatenate(accs, axis=0).reshape(3 * inc, H * W)

    # 1x1 conv (MXU) + folded BN shift + ReLU, lane-dense along H*W.
    y = jnp.dot(w1_ref[...], acc, preferred_element_type=jnp.float32)
    y = jnp.maximum(y + b_ref[...], 0.0)
    o_ref[0] = y.astype(o_ref.dtype)


def srm_conv2d_separate(x_nchw, inc, outc, w1_oi, bn_gamma, bn_beta,
                        bn_mean, bn_var, bn_eps=1e-5):
    """x_nchw: (B, inc, H, W) float32  ->  (B, outc, H, W) float32."""
    B, C_in, H, W = x_nchw.shape
    assert C_in == inc
    HW = H * W

    # --- host-side parameter folding -----------------------------------------
    # eval-mode BN folded into the (bias-free) 1x1 conv: y*scale + shift
    scale = bn_gamma / jnp.sqrt(bn_var + bn_eps)          # (outc,)
    shift = bn_beta - bn_mean * scale                     # (outc,)

    # SRM output channel oc uses filter k = oc//inc on input channel c = oc//3
    # (np.repeat filter bank + groups=inc in F.conv2d).  The kernel emits its
    # clipped SRM maps in filter-major order j = k*inc + c, so scatter-add the
    # BN-scaled 1x1 weight columns onto that ordering (duplicate (k, c) pairs
    # accumulate, which is exactly the original sum over duplicated channels).
    oc_idx = np.arange(3 * inc)
    j_idx = (oc_idx // inc) * inc + (oc_idx // 3)
    w1_fm = jnp.zeros((outc, 3 * inc), jnp.float32)
    w1_fm = w1_fm.at[:, j_idx].add(w1_oi * scale[:, None])   # (outc, 3*inc)
    bias = shift[:, None].astype(jnp.float32)                 # (outc, 1)

    # --- layout: stay NCHW, just zero-pad the spatial dims (padding=2) -------
    x_pad = jnp.pad(x_nchw, ((0, 0), (0, 0), (2, 2), (2, 2)))

    # Per-grid-step VMEM footprint estimate: double-buffered in/out blocks plus
    # in-kernel slabs.  Used to raise the scoped-VMEM limit (v5e default 16MiB),
    # capped at 64 MiB (v7x physical).
    est = 4 * (2 * inc * (H + 4) * (W + 4)        # input double-buffer
               + 2 * outc * HW                    # output double-buffer
               + (3 * inc + 2 * inc + outc) * HW  # acc + slice temps + y
               + 2 * (3 * inc * outc + outc))     # weights / bias
    vmem_limit = int(min(max(2 * est, 32 << 20), 64 << 20))

    out = pl.pallas_call(
        srm_fused_kernel,
        out_shape=jax.ShapeDtypeStruct((B, outc, HW), jnp.float32),
        grid_spec=pltpu.PrefetchScalarGridSpec(
            num_scalar_prefetch=0,
            grid=(B,),
            in_specs=[
                pl.BlockSpec((1, inc, H + 4, W + 4), lambda b: (b, 0, 0, 0)),
                pl.BlockSpec((outc, 3 * inc), lambda b: (0, 0)),
                pl.BlockSpec((outc, 1), lambda b: (0, 0)),
            ],
            out_specs=pl.BlockSpec((1, outc, HW), lambda b: (b, 0, 0)),
        ),
        compiler_params=pltpu.CompilerParams(
            dimension_semantics=("parallel",),
            vmem_limit_bytes=vmem_limit),
    )(x_pad, w1_fm, bias)

    # (B, outc, H*W) -> (B, outc, H, W): contiguous trailing reshape, free.
    return out.reshape(B, outc, H, W)


# -----------------------------------------------------------------------------
# Pure-JAX reference (mirrors the PyTorch ops) for a sanity check
# -----------------------------------------------------------------------------
def reference(x_nchw, inc, outc, w1_oi, bn_gamma, bn_beta, bn_mean, bn_var,
              bn_eps=1e-5):
    srm = jnp.asarray(build_srm_kernel(inc))              # (3*inc, 1, 5, 5)
    out = lax.conv_general_dilated(
        x_nchw, srm, window_strides=(1, 1), padding=((2, 2), (2, 2)),
        dimension_numbers=("NCHW", "OIHW", "NCHW"), feature_group_count=inc)
    out = jnp.clip(out, -3.0, 3.0)
    w1 = w1_oi[:, :, None, None]                          # (outc, 3*inc, 1, 1)
    out = lax.conv_general_dilated(
        out, w1, window_strides=(1, 1), padding=((0, 0), (0, 0)),
        dimension_numbers=("NCHW", "OIHW", "NCHW"))
    scale = bn_gamma / jnp.sqrt(bn_var + bn_eps)
    shift = bn_beta - bn_mean * scale
    out = out * scale[None, :, None, None] + shift[None, :, None, None]
    return jnp.maximum(out, 0.0)


if __name__ == "__main__":
    B, inc, H, W = 2, 4, 16, 16
    outc = 8

    key = jax.random.PRNGKey(0)
    kx, kw = jax.random.split(key)
    x = jax.random.normal(kx, (B, inc, H, W), dtype=jnp.float32)

    # 1x1 conv weight: kaiming_normal_(a=1) -> std = 1/sqrt(fan_in), fan_in=3*inc
    std = 1.0 / np.sqrt(3 * inc)
    w1_oi = jax.random.normal(kw, (outc, 3 * inc), dtype=jnp.float32) * std

    # BatchNorm2d default (freshly-initialized) parameters, inference mode
    bn_gamma = jnp.ones((outc,), jnp.float32)
    bn_beta = jnp.zeros((outc,), jnp.float32)
    bn_mean = jnp.zeros((outc,), jnp.float32)
    bn_var = jnp.ones((outc,), jnp.float32)

    out = jax.block_until_ready(
        srm_conv2d_separate(x, inc, outc, w1_oi, bn_gamma, bn_beta,
                            bn_mean, bn_var))

    ref = jax.block_until_ready(
        reference(x, inc, outc, w1_oi, bn_gamma, bn_beta, bn_mean, bn_var))
    np.testing.assert_allclose(np.asarray(out), np.asarray(ref),
                               rtol=1e-4, atol=1e-4)

    print("KERNEL_OK")
</pallas_src>

<mosaic_0001>
module attributes {stable_mosaic.version = 11 : i64} {
  func.func @srm_fused_kernel(%arg0: i32, %arg1: memref<1x4x20x20xf32, #tpu.memory_space<vmem>>, %arg2: memref<8x12xf32, #tpu.memory_space<vmem>>, %arg3: memref<8x1xf32, #tpu.memory_space<vmem>>, %arg4: memref<1x8x256xf32, #tpu.memory_space<vmem>>) attributes {dimension_semantics = [#tpu.dimension_semantics<parallel>], iteration_bounds = array<i64: 2>, scalar_prefetch = 0 : i64, scratch_operands = 0 : i64, tpu.core_type = #tpu.core_type<tc>, window_params = [{transform_indices = @transform_0, window_bounds = array<i64: 1, 4, 20, 20>}, {pipeline_mode = #tpu.pipeline_mode<synchronous>, transform_indices = @transform_1, window_bounds = array<i64: 8, 12>}, {pipeline_mode = #tpu.pipeline_mode<synchronous>, transform_indices = @transform_2, window_bounds = array<i64: 8, 1>}, {transform_indices = @transform_3, window_bounds = array<i64: 1, 8, 256>}]} {
    %c0 = arith.constant 0 : index
    %c0_0 = arith.constant 0 : index
    %c0_1 = arith.constant 0 : index
    %c0_2 = arith.constant 0 : index
    %0 = vector.load %arg1[%c0, %c0_0, %c0_1, %c0_2] : memref<1x4x20x20xf32, #tpu.memory_space<vmem>>, vector<1x4x20x20xf32>
    %1 = vector.shape_cast %0 : vector<1x4x20x20xf32> to vector<4x20x20xf32>
    %2 = vector.extract_strided_slice %1 {offsets = [0, 1, 1], sizes = [4, 16, 16], strides = [1, 1, 1]} : vector<4x20x20xf32> to vector<4x16x16xf32>
    %cst = arith.constant -2.500000e-01 : f32
    %3 = vector.broadcast %cst : f32 to vector<4x16x16xf32>
    %4 = arith.mulf %2, %3 : vector<4x16x16xf32>
    %5 = vector.extract_strided_slice %1 {offsets = [0, 1, 2], sizes = [4, 16, 16], strides = [1, 1, 1]} : vector<4x20x20xf32> to vector<4x16x16xf32>
    %cst_3 = arith.constant 5.000000e-01 : f32
    %6 = vector.broadcast %cst_3 : f32 to vector<4x16x16xf32>
    %7 = arith.mulf %5, %6 : vector<4x16x16xf32>
    %8 = arith.addf %4, %7 : vector<4x16x16xf32>
    %9 = vector.extract_strided_slice %1 {offsets = [0, 1, 3], sizes = [4, 16, 16], strides = [1, 1, 1]} : vector<4x20x20xf32> to vector<4x16x16xf32>
    %cst_4 = arith.constant -2.500000e-01 : f32
    %10 = vector.broadcast %cst_4 : f32 to vector<4x16x16xf32>
    %11 = arith.mulf %9, %10 : vector<4x16x16xf32>
    %12 = arith.addf %8, %11 : vector<4x16x16xf32>
    %13 = vector.extract_strided_slice %1 {offsets = [0, 2, 1], sizes = [4, 16, 16], strides = [1, 1, 1]} : vector<4x20x20xf32> to vector<4x16x16xf32>
    %cst_5 = arith.constant 5.000000e-01 : f32
    %14 = vector.broadcast %cst_5 : f32 to vector<4x16x16xf32>
    %15 = arith.mulf %13, %14 : vector<4x16x16xf32>
    %16 = arith.addf %12, %15 : vector<4x16x16xf32>
    %17 = vector.extract_strided_slice %1 {offsets = [0, 2, 2], sizes = [4, 16, 16], strides = [1, 1, 1]} : vector<4x20x20xf32> to vector<4x16x16xf32>
    %cst_6 = arith.constant -1.000000e+00 : f32
    %18 = vector.broadcast %cst_6 : f32 to vector<4x16x16xf32>
    %19 = arith.mulf %17, %18 : vector<4x16x16xf32>
    %20 = arith.addf %16, %19 : vector<4x16x16xf32>
    %21 = vector.extract_strided_slice %1 {offsets = [0, 2, 3], sizes = [4, 16, 16], strides = [1, 1, 1]} : vector<4x20x20xf32> to vector<4x16x16xf32>
    %cst_7 = arith.constant 5.000000e-01 : f32
    %22 = vector.broadcast %cst_7 : f32 to vector<4x16x16xf32>
    %23 = arith.mulf %21, %22 : vector<4x16x16xf32>
    %24 = arith.addf %20, %23 : vector<4x16x16xf32>
    %25 = vector.extract_strided_slice %1 {offsets = [0, 3, 1], sizes = [4, 16, 16], strides = [1, 1, 1]} : vector<4x20x20xf32> to vector<4x16x16xf32>
    %cst_8 = arith.constant -2.500000e-01 : f32
    %26 = vector.broadcast %cst_8 : f32 to vector<4x16x16xf32>
    %27 = arith.mulf %25, %26 : vector<4x16x16xf32>
    %28 = arith.addf %24, %27 : vector<4x16x16xf32>
    %29 = vector.extract_strided_slice %1 {offsets = [0, 3, 2], sizes = [4, 16, 16], strides = [1, 1, 1]} : vector<4x20x20xf32> to vector<4x16x16xf32>
    %cst_9 = arith.constant 5.000000e-01 : f32
    %30 = vector.broadcast %cst_9 : f32 to vector<4x16x16xf32>
    %31 = arith.mulf %29, %30 : vector<4x16x16xf32>
    %32 = arith.addf %28, %31 : vector<4x16x16xf32>
    %33 = vector.extract_strided_slice %1 {offsets = [0, 3, 3], sizes = [4, 16, 16], strides = [1, 1, 1]} : vector<4x20x20xf32> to vector<4x16x16xf32>
    %cst_10 = arith.constant -2.500000e-01 : f32
    %34 = vector.broadcast %cst_10 : f32 to vector<4x16x16xf32>
    %35 = arith.mulf %33, %34 : vector<4x16x16xf32>
    %36 = arith.addf %32, %35 : vector<4x16x16xf32>
    %cst_11 = arith.constant -3.000000e+00 : f32
    %cst_12 = arith.constant 3.000000e+00 : f32
    %37 = vector.broadcast %cst_11 : f32 to vector<4x16x16xf32>
    %38 = arith.maximumf %37, %36 : vector<4x16x16xf32>
    %39 = vector.broadcast %cst_12 : f32 to vector<4x16x16xf32>
    %40 = arith.minimumf %39, %38 : vector<4x16x16xf32>
    %41 = vector.extract_strided_slice %1 {offsets = [0, 0, 0], sizes = [4, 16, 16], strides = [1, 1, 1]} : vector<4x20x20xf32> to vector<4x16x16xf32>
    %cst_13 = arith.constant -0.0833333358 : f32
    %42 = vector.broadcast %cst_13 : f32 to vector<4x16x16xf32>
    %43 = arith.mulf %41, %42 : vector<4x16x16xf32>
    %44 = vector.extract_strided_slice %1 {offsets = [0, 0, 1], sizes = [4, 16, 16], strides = [1, 1, 1]} : vector<4x20x20xf32> to vector<4x16x16xf32>
    %cst_14 = arith.constant 0.166666672 : f32
    %45 = vector.broadcast %cst_14 : f32 to vector<4x16x16xf32>
    %46 = arith.mulf %44, %45 : vector<4x16x16xf32>
    %47 = arith.addf %43, %46 : vector<4x16x16xf32>
    %48 = vector.extract_strided_slice %1 {offsets = [0, 0, 2], sizes = [4, 16, 16], strides = [1, 1, 1]} : vector<4x20x20xf32> to vector<4x16x16xf32>
    %cst_15 = arith.constant -0.166666672 : f32
    %49 = vector.broadcast %cst_15 : f32 to vector<4x16x16xf32>
    %50 = arith.mulf %48, %49 : vector<4x16x16xf32>
    %51 = arith.addf %47, %50 : vector<4x16x16xf32>
    %52 = vector.extract_strided_slice %1 {offsets = [0, 0, 3], sizes = [4, 16, 16], strides = [1, 1, 1]} : vector<4x20x20xf32> to vector<4x16x16xf32>
    %cst_16 = arith.constant 0.166666672 : f32
    %53 = vector.broadcast %cst_16 : f32 to vector<4x16x16xf32>
    %54 = arith.mulf %52, %53 : vector<4x16x16xf32>
    %55 = arith.addf %51, %54 : vector<4x16x16xf32>
    %56 = vector.extract_strided_slice %1 {offsets = [0, 0, 4], sizes = [4, 16, 16], strides = [1, 1, 1]} : vector<4x20x20xf32> to vector<4x16x16xf32>
    %cst_17 = arith.constant -0.0833333358 : f32
    %57 = vector.broadcast %cst_17 : f32 to vector<4x16x16xf32>
    %58 = arith.mulf %56, %57 : vector<4x16x16xf32>
    %59 = arith.addf %55, %58 : vector<4x16x16xf32>
    %60 = vector.extract_strided_slice %1 {offsets = [0, 1, 0], sizes = [4, 16, 16], strides = [1, 1, 1]} : vector<4x20x20xf32> to vector<4x16x16xf32>
    %cst_18 = arith.constant 0.166666672 : f32
    %61 = vector.broadcast %cst_18 : f32 to vector<4x16x16xf32>
    %62 = arith.mulf %60, %61 : vector<4x16x16xf32>
    %63 = arith.addf %59, %62 : vector<4x16x16xf32>
    %64 = vector.extract_strided_slice %1 {offsets = [0, 1, 1], sizes = [4, 16, 16], strides = [1, 1, 1]} : vector<4x20x20xf32> to vector<4x16x16xf32>
    %cst_19 = arith.constant -5.000000e-01 : f32
    %65 = vector.broadcast %cst_19 : f32 to vector<4x16x16xf32>
    %66 = arith.mulf %64, %65 : vector<4x16x16xf32>
    %67 = arith.addf %63, %66 : vector<4x16x16xf32>
    %68 = vector.extract_strided_slice %1 {offsets = [0, 1, 2], sizes = [4, 16, 16], strides = [1, 1, 1]} : vector<4x20x20xf32> to vector<4x16x16xf32>
    %cst_20 = arith.constant 0.666666686 : f32
    %69 = vector.broadcast %cst_20 : f32 to vector<4x16x16xf32>
    %70 = arith.mulf %68, %69 : vector<4x16x16xf32>
    %71 = arith.addf %67, %70 : vector<4x16x16xf32>
    %72 = vector.extract_strided_slice %1 {offsets = [0, 1, 3], sizes = [4, 16, 16], strides = [1, 1, 1]} : vector<4x20x20xf32> to vector<4x16x16xf32>
    %cst_21 = arith.constant -5.000000e-01 : f32
    %73 = vector.broadcast %cst_21 : f32 to vector<4x16x16xf32>
    %74 = arith.mulf %72, %73 : vector<4x16x16xf32>
    %75 = arith.addf %71, %74 : vector<4x16x16xf32>
    %76 = vector.extract_strided_slice %1 {offsets = [0, 1, 4], sizes = [4, 16, 16], strides = [1, 1, 1]} : vector<4x20x20xf32> to vector<4x16x16xf32>
    %cst_22 = arith.constant 0.166666672 : f32
    %77 = vector.broadcast %cst_22 : f32 to vector<4x16x16xf32>
    %78 = arith.mulf %76, %77 : vector<4x16x16xf32>
    %79 = arith.addf %75, %78 : vector<4x16x16xf32>
    %80 = vector.extract_strided_slice %1 {offsets = [0, 2, 0], sizes = [4, 16, 16], strides = [1, 1, 1]} : vector<4x20x20xf32> to vector<4x16x16xf32>
    %cst_23 = arith.constant -0.166666672 : f32
    %81 = vector.broadcast %cst_23 : f32 to vector<4x16x16xf32>
    %82 = arith.mulf %80, %81 : vector<4x16x16xf32>
    %83 = arith.addf %79, %82 : vector<4x16x16xf32>
    %84 = vector.extract_strided_slice %1 {offsets = [0, 2, 1], sizes = [4, 16, 16], strides = [1, 1, 1]} : vector<4x20x20xf32> to vector<4x16x16xf32>
    %cst_24 = arith.constant 0.666666686 : f32
    %85 = vector.broadcast %cst_24 : f32 to vector<4x16x16xf32>
    %86 = arith.mulf %84, %85 : vector<4x16x16xf32>
    %87 = arith.addf %83, %86 : vector<4x16x16xf32>
    %88 = vector.extract_strided_slice %1 {offsets = [0, 2, 2], sizes = [4, 16, 16], strides = [1, 1, 1]} : vector<4x20x20xf32> to vector<4x16x16xf32>
    %cst_25 = arith.constant -1.000000e+00 : f32
    %89 = vector.broadcast %cst_25 : f32 to vector<4x16x16xf32>
    %90 = arith.mulf %88, %89 : vector<4x16x16xf32>
    %91 = arith.addf %87, %90 : vector<4x16x16xf32>
    %92 = vector.extract_strided_slice %1 {offsets = [0, 2, 3], sizes = [4, 16, 16], strides = [1, 1, 1]} : vector<4x20x20xf32> to vector<4x16x16xf32>
    %cst_26 = arith.constant 0.666666686 : f32
    %93 = vector.broadcast %cst_26 : f32 to vector<4x16x16xf32>
    %94 = arith.mulf %92, %93 : vector<4x16x16xf32>
    %95 = arith.addf %91, %94 : vector<4x16x16xf32>
    %96 = vector.extract_strided_slice %1 {offsets = [0, 2, 4], sizes = [4, 16, 16], strides = [1, 1, 1]} : vector<4x20x20xf32> to vector<4x16x16xf32>
    %cst_27 = arith.constant -0.166666672 : f32
    %97 = vector.broadcast %cst_27 : f32 to vector<4x16x16xf32>
    %98 = arith.mulf %96, %97 : vector<4x16x16xf32>
    %99 = arith.addf %95, %98 : vector<4x16x16xf32>
    %100 = vector.extract_strided_slice %1 {offsets = [0, 3, 0], sizes = [4, 16, 16], strides = [1, 1, 1]} : vector<4x20x20xf32> to vector<4x16x16xf32>
    %cst_28 = arith.constant 0.166666672 : f32
    %101 = vector.broadcast %cst_28 : f32 to vector<4x16x16xf32>
    %102 = arith.mulf %100, %101 : vector<4x16x16xf32>
    %103 = arith.addf %99, %102 : vector<4x16x16xf32>
    %104 = vector.extract_strided_slice %1 {offsets = [0, 3, 1], sizes = [4, 16, 16], strides = [1, 1, 1]} : vector<4x20x20xf32> to vector<4x16x16xf32>
    %cst_29 = arith.constant -5.000000e-01 : f32
    %105 = vector.broadcast %cst_29 : f32 to vector<4x16x16xf32>
    %106 = arith.mulf %104, %105 : vector<4x16x16xf32>
    %107 = arith.addf %103, %106 : vector<4x16x16xf32>
    %108 = vector.extract_strided_slice %1 {offsets = [0, 3, 2], sizes = [4, 16, 16], strides = [1, 1, 1]} : vector<4x20x20xf32> to vector<4x16x16xf32>
    %cst_30 = arith.constant 0.666666686 : f32
    %109 = vector.broadcast %cst_30 : f32 to vector<4x16x16xf32>
    %110 = arith.mulf %108, %109 : vector<4x16x16xf32>
    %111 = arith.addf %107, %110 : vector<4x16x16xf32>
    %112 = vector.extract_strided_slice %1 {offsets = [0, 3, 3], sizes = [4, 16, 16], strides = [1, 1, 1]} : vector<4x20x20xf32> to vector<4x16x16xf32>
    %cst_31 = arith.constant -5.000000e-01 : f32
    %113 = vector.broadcast %cst_31 : f32 to vector<4x16x16xf32>
    %114 = arith.mulf %112, %113 : vector<4x16x16xf32>
    %115 = arith.addf %111, %114 : vector<4x16x16xf32>
    %116 = vector.extract_strided_slice %1 {offsets = [0, 3, 4], sizes = [4, 16, 16], strides = [1, 1, 1]} : vector<4x20x20xf32> to vector<4x16x16xf32>
    %cst_32 = arith.constant 0.166666672 : f32
    %117 = vector.broadcast %cst_32 : f32 to vector<4x16x16xf32>
    %118 = arith.mulf %116, %117 : vector<4x16x16xf32>
    %119 = arith.addf %115, %118 : vector<4x16x16xf32>
    %120 = vector.extract_strided_slice %1 {offsets = [0, 4, 0], sizes = [4, 16, 16], strides = [1, 1, 1]} : vector<4x20x20xf32> to vector<4x16x16xf32>
    %cst_33 = arith.constant -0.0833333358 : f32
    %121 = vector.broadcast %cst_33 : f32 to vector<4x16x16xf32>
    %122 = arith.mulf %120, %121 : vector<4x16x16xf32>
    %123 = arith.addf %119, %122 : vector<4x16x16xf32>
    %124 = vector.extract_strided_slice %1 {offsets = [0, 4, 1], sizes = [4, 16, 16], strides = [1, 1, 1]} : vector<4x20x20xf32> to vector<4x16x16xf32>
    %cst_34 = arith.constant 0.166666672 : f32
    %125 = vector.broadcast %cst_34 : f32 to vector<4x16x16xf32>
    %126 = arith.mulf %124, %125 : vector<4x16x16xf32>
    %127 = arith.addf %123, %126 : vector<4x16x16xf32>
    %128 = vector.extract_strided_slice %1 {offsets = [0, 4, 2], sizes = [4, 16, 16], strides = [1, 1, 1]} : vector<4x20x20xf32> to vector<4x16x16xf32>
    %cst_35 = arith.constant -0.166666672 : f32
    %129 = vector.broadcast %cst_35 : f32 to vector<4x16x16xf32>
    %130 = arith.mulf %128, %129 : vector<4x16x16xf32>
    %131 = arith.addf %127, %130 : vector<4x16x16xf32>
    %132 = vector.extract_strided_slice %1 {offsets = [0, 4, 3], sizes = [4, 16, 16], strides = [1, 1, 1]} : vector<4x20x20xf32> to vector<4x16x16xf32>
    %cst_36 = arith.constant 0.166666672 : f32
    %133 = vector.broadcast %cst_36 : f32 to vector<4x16x16xf32>
    %134 = arith.mulf %132, %133 : vector<4x16x16xf32>
    %135 = arith.addf %131, %134 : vector<4x16x16xf32>
    %136 = vector.extract_strided_slice %1 {offsets = [0, 4, 4], sizes = [4, 16, 16], strides = [1, 1, 1]} : vector<4x20x20xf32> to vector<4x16x16xf32>
    %cst_37 = arith.constant -0.0833333358 : f32
    %137 = vector.broadcast %cst_37 : f32 to vector<4x16x16xf32>
    %138 = arith.mulf %136, %137 : vector<4x16x16xf32>
    %139 = arith.addf %135, %138 : vector<4x16x16xf32>
    %cst_38 = arith.constant -3.000000e+00 : f32
    %cst_39 = arith.constant 3.000000e+00 : f32
    %140 = vector.broadcast %cst_38 : f32 to vector<4x16x16xf32>
    %141 = arith.maximumf %140, %139 : vector<4x16x16xf32>
    %142 = vector.broadcast %cst_39 : f32 to vector<4x16x16xf32>
    %143 = arith.minimumf %142, %141 : vector<4x16x16xf32>
    %144 = vector.extract_strided_slice %1 {offsets = [0, 2, 1], sizes = [4, 16, 16], strides = [1, 1, 1]} : vector<4x20x20xf32> to vector<4x16x16xf32>
    %cst_40 = arith.constant 5.000000e-01 : f32
    %145 = vector.broadcast %cst_40 : f32 to vector<4x16x16xf32>
    %146 = arith.mulf %144, %145 : vector<4x16x16xf32>
    %147 = vector.extract_strided_slice %1 {offsets = [0, 2, 2], sizes = [4, 16, 16], strides = [1, 1, 1]} : vector<4x20x20xf32> to vector<4x16x16xf32>
    %cst_41 = arith.constant -1.000000e+00 : f32
    %148 = vector.broadcast %cst_41 : f32 to vector<4x16x16xf32>
    %149 = arith.mulf %147, %148 : vector<4x16x16xf32>
    %150 = arith.addf %146, %149 : vector<4x16x16xf32>
    %151 = vector.extract_strided_slice %1 {offsets = [0, 2, 3], sizes = [4, 16, 16], strides = [1, 1, 1]} : vector<4x20x20xf32> to vector<4x16x16xf32>
    %cst_42 = arith.constant 5.000000e-01 : f32
    %152 = vector.broadcast %cst_42 : f32 to vector<4x16x16xf32>
    %153 = arith.mulf %151, %152 : vector<4x16x16xf32>
    %154 = arith.addf %150, %153 : vector<4x16x16xf32>
    %cst_43 = arith.constant -3.000000e+00 : f32
    %cst_44 = arith.constant 3.000000e+00 : f32
    %155 = vector.broadcast %cst_43 : f32 to vector<4x16x16xf32>
    %156 = arith.maximumf %155, %154 : vector<4x16x16xf32>
    %157 = vector.broadcast %cst_44 : f32 to vector<4x16x16xf32>
    %158 = arith.minimumf %157, %156 : vector<4x16x16xf32>
    %159 = tpu.concatenate %40, %143, %158 in 0 : vector<4x16x16xf32>, vector<4x16x16xf32>, vector<4x16x16xf32> -> vector<12x16x16xf32>
    %160 = vector.shape_cast %159 : vector<12x16x16xf32> to vector<12x256xf32>
    %c0_45 = arith.constant 0 : index
    %c0_46 = arith.constant 0 : index
    %161 = vector.load %arg2[%c0_45, %c0_46] : memref<8x12xf32, #tpu.memory_space<vmem>>, vector<8x12xf32>
    %cst_47 = arith.constant dense<0.000000e+00> : vector<8x256xf32>
    %162 = tpu.matmul %161, %160, %cst_47 {dimension_numbers = #tpu.dot_dimension_numbers<[1], [0], [0], [1], [0, 0, 1, 1], [], []>} : vector<8x12xf32>, vector<12x256xf32>, vector<8x256xf32> -> vector<8x256xf32>
    %c0_48 = arith.constant 0 : index
    %c0_49 = arith.constant 0 : index
    %163 = vector.load %arg3[%c0_48, %c0_49] : memref<8x1xf32, #tpu.memory_space<vmem>>, vector<8x1xf32>
    %164 = vector.broadcast %163 : vector<8x1xf32> to vector<8x256xf32>
    %165 = arith.addf %162, %164 : vector<8x256xf32>
    %cst_50 = arith.constant 0.000000e+00 : f32
    %166 = vector.broadcast %cst_50 : f32 to vector<8x256xf32>
    %167 = arith.maximumf %165, %166 : vector<8x256xf32>
    %c0_51 = arith.constant 0 : index
    %c0_52 = arith.constant 0 : index
    %c0_53 = arith.constant 0 : index
    %168 = vector.load %arg4[%c0_51, %c0_52, %c0_53] : memref<1x8x256xf32, #tpu.memory_space<vmem>>, vector<1x8x256xf32>
    %169 = vector.shape_cast %168 : vector<1x8x256xf32> to vector<8x256xf32>
    %170 = vector.shape_cast %167 : vector<8x256xf32> to vector<1x8x256xf32>
    tpu.vector_store %arg4[%c0_51, %c0_52, %c0_53], %170 {strides = array<i32>} : memref<1x8x256xf32, #tpu.memory_space<vmem>>, vector<1x8x256xf32>,
    return
  }
  func.func @transform_0(%arg0: i32) -> (i32, i32, i32, i32) {
    %c0_i32 = arith.constant 0 : i32
    %c0_i32_0 = arith.constant 0 : i32
    %c0_i32_1 = arith.constant 0 : i32
    %c0_i32_2 = arith.constant 0 : i32
    return %arg0, %c0_i32, %c0_i32_0, %c0_i32_1 : i32, i32, i32, i32
  }
  func.func @transform_1(%arg0: i32) -> (i32, i32) {
    %c0_i32 = arith.constant 0 : i32
    %c0_i32_0 = arith.constant 0 : i32
    %c0_i32_1 = arith.constant 0 : i32
    return %c0_i32, %c0_i32_0 : i32, i32
  }
  func.func @transform_2(%arg0: i32) -> (i32, i32) {
    %c0_i32 = arith.constant 0 : i32
    %c0_i32_0 = arith.constant 0 : i32
    %c0_i32_1 = arith.constant 0 : i32
    return %c0_i32, %c0_i32_0 : i32, i32
  }
  func.func @transform_3(%arg0: i32) -> (i32, i32, i32) {
    %c0_i32 = arith.constant 0 : i32
    %c0_i32_0 = arith.constant 0 : i32
    %c0_i32_1 = arith.constant 0 : i32
    return %arg0, %c0_i32, %c0_i32_0 : i32, i32, i32
  }
}

</mosaic_0001>

<llo_original>
// kernel: tpu_custom_call.1
$region0: #{tpu_custom_call.1}
  #allocation0 [shape = 'u32[]', space=smem, size = 0x4, offset = 0x4, fixed_abs, tag = 'smem constant byte address 0x4 - core index']
  #allocation1 [shape = 'u32[144,128]{1,0:T(1,128)}', space=vmem, size = 0x12000, scoped, tag = 'internal scratch']
  %s0 = inlined_call_operand.vmem [shape: f32[2,4,20,20], index: 0, kind: input, shape index: {}]
  %s1 = inlined_call_operand.vmem [shape: f32[8,12], index: 1, kind: input, shape index: {}]
  %s2 = inlined_call_operand.vmem [shape: f32[8,1], index: 2, kind: input, shape index: {}]
  %s3 = inlined_call_operand.hbm [shape: f32[2,8,256], index: 3, kind: output, shape index: {}]
  %s4 = sld [smem:[#allocation0]]
  $region45: #{tpu_custom_call.1} parent=0
    _
  %s6 = ssub.s32 1, %s4
  %s7 = scalar_select 0, %s6, %s4
  $region1: #{tpu_custom_call.1} parent=0
    #allocation2 [shape = 'u8[16384]{0}', space=vmem, size = 0x4000, scoped, tag = 'output window, operand 0']
    #allocation3 [shape = 's32[2]{0}', space=sflag, size = 0x8, scoped, tag = 'scoped memory for tpu_custom_call.1']
    %8 = vsyncpa [#allocation3], 0
    %s9 = scalar_lea.sflag [#allocation3], 1
    %10 = vsyncpa %s9, 0
    loop: start=0, step=1, limit=4
    $region2: #{tpu_custom_call.1} parent=1 // loop_pre_header
      _
    $region3: #{tpu_custom_call.1} parent=1 // loop_header
      %s12 = sphi 0, %s16
      %p13 = scmp.ge.s32.totalorder %s12, 4
      %s22 = sphi 0, %s24
      %s25 = sphi 0, %s22
      %s26 = sphi 0, %s25
      %s42 = sphi 0, %s26
      %s46 = sphi 0, %s46
      %s48 = sphi 0, %s46
      %s49 = sphi 0, %s48
      %s63 = sphi 0, %s49
      %s67 = sphi 0, %s67
      %s69 = sphi 0, %s67
      %s70 = sphi 0, %s69
      %s84 = sphi 0, %s70
      %s90 = sphi 0, %s92
      %s93 = sphi 0, %s90
      %s94 = sphi 0, %s93
      %s110 = sphi 0, %s94
    $region4: #{tpu_custom_call.1} parent=1 // loop_header_branch
      %15 = sbr.rel (%p13) target = $region8
    $region5: #{tpu_custom_call.1} parent=1 // loop_body
      %s17 = ssub.s32 %s12, 1
      %s18 = ssub.s32 %s12, 2
      %s19 = sadd.s32 %s12, 1
      %s20 = ssub.s32 %s12, %s19
      %p21 = scmp.eq.s32.totalorder %s20, 0
      %s23 = sadd.s32 %s22, 1
      %s24 = scalar_select %p21, %s22, %s23
      %p27 = pneg %p21
      %p28 = scmp.eq.s32.totalorder %s12, 1
      %p29 = por %p27, %p28
      %p30 = scmp.ne.s32.totalorder %s22, %s25
      %p31 = scmp.eq.s32.totalorder %s12, 0
      %p32 = por %p30, %p31
      %p33 = scmp.ne.s32.totalorder %s22, %s25
      %p34 = scmp.eq.s32.totalorder %s17, 1
      %p35 = por %p33, %p34
      %p36 = scmp.ne.s32.totalorder %s25, %s26
      %p37 = scmp.eq.s32.totalorder %s17, 0
      %p38 = por %p36, %p37
      %p39 = scmp.ne.s32.totalorder %s25, %s26
      %p40 = scmp.eq.s32.totalorder %s18, 1
      %p41 = por %p39, %p40
      %p43 = scmp.ne.s32.totalorder %s26, %s42
      %p44 = scmp.eq.s32.totalorder %s18, 0
      %p45 = por %p43, %p44
      %s47 = sadd.s32 %s46, 1
      %p50 = scmp.eq.s32.totalorder %s12, 1
      %p51 = scmp.ne.s32.totalorder %s46, %s48
      %p52 = scmp.eq.s32.totalorder %s12, 0
      %p53 = por %p51, %p52
      %p54 = scmp.ne.s32.totalorder %s46, %s48
      %p55 = scmp.eq.s32.totalorder %s17, 1
      %p56 = por %p54, %p55
      %p57 = scmp.ne.s32.totalorder %s48, %s49
      %p58 = scmp.eq.s32.totalorder %s17, 0
      %p59 = por %p57, %p58
      %p60 = scmp.ne.s32.totalorder %s48, %s49
      %p61 = scmp.eq.s32.totalorder %s18, 1
      %p62 = por %p60, %p61
      %p64 = scmp.ne.s32.totalorder %s49, %s63
      %p65 = scmp.eq.s32.totalorder %s18, 0
      %p66 = por %p64, %p65
      %s68 = sadd.s32 %s67, 1
      %p71 = scmp.eq.s32.totalorder %s12, 1
      %p72 = scmp.ne.s32.totalorder %s67, %s69
      %p73 = scmp.eq.s32.totalorder %s12, 0
      %p74 = por %p72, %p73
      %p75 = scmp.ne.s32.totalorder %s67, %s69
      %p76 = scmp.eq.s32.totalorder %s17, 1
      %p77 = por %p75, %p76
      %p78 = scmp.ne.s32.totalorder %s69, %s70
      %p79 = scmp.eq.s32.totalorder %s17, 0
      %p80 = por %p78, %p79
      %p81 = scmp.ne.s32.totalorder %s69, %s70
      %p82 = scmp.eq.s32.totalorder %s18, 1
      %p83 = por %p81, %p82
      %p85 = scmp.ne.s32.totalorder %s70, %s84
      %p86 = scmp.eq.s32.totalorder %s18, 0
      %p87 = por %p85, %p86
      %s88 = ssub.s32 %s12, %s19
      %p89 = scmp.eq.s32.totalorder %s88, 0
      %s91 = sadd.s32 %s90, 1
      %s92 = scalar_select %p89, %s90, %s91
      %p95 = pneg %p89
      %p96 = scmp.eq.s32.totalorder %s12, 1
      %p97 = por %p95, %p96
      %p98 = scmp.ne.s32.totalorder %s90, %s93
      %p99 = scmp.eq.s32.totalorder %s12, 0
      %p100 = por %p98, %p99
      %p101 = scmp.ne.s32.totalorder %s90, %s93
      %p102 = scmp.eq.s32.totalorder %s17, 1
      %p103 = por %p101, %p102
      %p104 = scmp.ne.s32.totalorder %s93, %s94
      %p105 = scmp.eq.s32.totalorder %s17, 0
      %p106 = por %p104, %p105
      %p107 = scmp.ne.s32.totalorder %s93, %s94
      %p108 = scmp.eq.s32.totalorder %s18, 1
      %p109 = por %p107, %p108
      %p111 = scmp.ne.s32.totalorder %s94, %s110
      %p112 = scmp.eq.s32.totalorder %s18, 0
      %p113 = por %p111, %p112
      %p114 = scmp.le.s32.totalorder 1, %s12
      %p115 = scmp.lt.s32.totalorder %s12, 3
      %p116 = pnand %p114, %p115
      %p117 = pneg %p116
      // Predicated region
      $region9: #{tpu_custom_call.1} parent=5 // pred_check
        _
      $region10: #{tpu_custom_call.1} parent=5 // pred_check_branch
        %119 = sbr.rel (%p116) target = $region12
      $region11: #{tpu_custom_call.1} parent=5 // pred_region
        %s120 = ssub.s32 %s12, 1
        // Predicated region
        $region13: #{tpu_custom_call.1} parent=11 // pred_check
          %p121 = pneg %p59
        $region14: #{tpu_custom_call.1} parent=11 // pred_check_branch
          %123 = sbr.rel (%p121) target = $region16
        $region15: #{tpu_custom_call.1} parent=11 // pred_region
          _
        $region16: #{tpu_custom_call.1} parent=11 // pred_fallthru
          _
        // Predicated region
        $region17: #{tpu_custom_call.1} parent=11 // pred_check
          %p124 = pneg %p80
        $region18: #{tpu_custom_call.1} parent=11 // pred_check_branch
          %126 = sbr.rel (%p124) target = $region20
        $region19: #{tpu_custom_call.1} parent=11 // pred_region
          _
        $region20: #{tpu_custom_call.1} parent=11 // pred_fallthru
          _
      $region12: #{tpu_custom_call.1} parent=5 // pred_fallthru
        _
      %p127 = scmp.lt.s32.totalorder %s12, 2
      // Predicated region
      $region21: #{tpu_custom_call.1} parent=5 // pred_check
        %p128 = pneg %p127
      $region22: #{tpu_custom_call.1} parent=5 // pred_check_branch
        %130 = sbr.rel (%p128) target = $region24
      $region23: #{tpu_custom_call.1} parent=5 // pred_region
        // Predicated region
        $region25: #{tpu_custom_call.1} parent=23 // pred_check
          %p131 = pneg %p32
        $region26: #{tpu_custom_call.1} parent=23 // pred_check_branch
          %133 = sbr.rel (%p131) target = $region28
        $region27: #{tpu_custom_call.1} parent=23 // pred_region
          %p134 = scmp.lt.s32.totalorder %s12, 1
          %s135 = scalar_select %p134, %s12, 1
          %s136 = smul.addr %s135, 12
          %s137 = smul.addr %s136, 8
          %s138 = scalar_lea.vmem %s0, %s137
        $region28: #{tpu_custom_call.1} parent=23 // pred_fallthru
          _
      $region24: #{tpu_custom_call.1} parent=5 // pred_fallthru
        _
      %p139 = scmp.le.s32.totalorder 1, %s12
      %p140 = scmp.lt.s32.totalorder %s12, 3
      %p141 = pnand %p139, %p140
      %p142 = pneg %p141
      // Predicated region
      $region29: #{tpu_custom_call.1} parent=5 // pred_check
        _
      $region30: #{tpu_custom_call.1} parent=5 // pred_check_branch
        %144 = sbr.rel (%p141) target = $region32
      $region31: #{tpu_custom_call.1} parent=5 // pred_region
        %s145 = ssub.s32 %s12, 1
        %p146 = scmp.lt.s32.totalorder %s17, 1
        %s147 = scalar_select %p146, %s17, 1
        %s148 = smul.addr %s147, 12
        %s149 = smul.addr %s148, 8
        %s150 = scalar_lea.vmem %s0, %s149
        %p151 = pneg %p38
        %p152 = pneg %p35
        %p153 = pneg %p59
        %p154 = pneg %p56
        %p155 = pneg %p80
        %p156 = pneg %p77
        %p157 = pneg %p106
        %p158 = pneg %p103
        %s159 = sand.u32 %s93, 1
        %s160 = scalar_lea.sflag [#allocation3], %s159
        %s161 = sand.u32 %s93, 1
        %s162 = smul.addr %s161, 16
        %s163 = scalar_lea.vmem [#allocation2], %s162
        %p164 = scmp.lt.s32.totalorder %s17, 1
        %s165 = scalar_select %p164, %s17, 1
        %s166 = smul.addr %s165, 12
        %s167 = smul.addr %s166, 8
        %s168 = scalar_lea.vmem %s0, %s167
        %v169 = vld [vmem:[%s168] sm:$0xff]
        %v170 = vld [vmem:[%s168 + $0x8] sm:$0xff]
        %v171 = vld [vmem:[%s168 + $0x10] sm:$0xf]
        %v172 = vld [vmem:[%s168 + $0x18] sm:$0xff]
        %v173 = vld [vmem:[%s168 + $0x20] sm:$0xff]
        %v174 = vld [vmem:[%s168 + $0x28] sm:$0xf]
        %v175 = vld [vmem:[%s168 + $0x30] sm:$0xff]
        %v176 = vld [vmem:[%s168 + $0x38] sm:$0xff]
        %v177 = vld [vmem:[%s168 + $0x40] sm:$0xf]
        %v178 = vld [vmem:[%s168 + $0x48] sm:$0xff]
        %v179 = vld [vmem:[%s168 + $0x50] sm:$0xff]
        %v180 = vld [vmem:[%s168 + $0x58] sm:$0xf]
        %v181 = vmul.f32 %v169, -0.25
        %v182 = vmul.f32 %v170, -0.25
        %v183 = vmul.f32 %v171, -0.25
        %v184 = vmul.f32 %v172, -0.25
        %v185 = vmul.f32 %v173, -0.25
        %v186 = vmul.f32 %v174, -0.25
        %v187 = vmul.f32 %v175, -0.25
        %v188 = vmul.f32 %v176, -0.25
        %v189 = vmul.f32 %v177, -0.25
        %v190 = vmul.f32 %v178, -0.25
        %v191 = vmul.f32 %v179, -0.25
        %v192 = vmul.f32 %v180, -0.25
        %v193 = vmul.f32 %v169, 0.5
        %v194 = vmul.f32 %v170, 0.5
        %v195 = vmul.f32 %v171, 0.5
        %v196 = vmul.f32 %v172, 0.5
        %v197 = vmul.f32 %v173, 0.5
        %v198 = vmul.f32 %v174, 0.5
        %v199 = vmul.f32 %v175, 0.5
        %v200 = vmul.f32 %v176, 0.5
        %v201 = vmul.f32 %v177, 0.5
        %v202 = vmul.f32 %v178, 0.5
        %v203 = vmul.f32 %v179, 0.5
        %v204 = vmul.f32 %v180, 0.5
        %217 = vrot.lane.b32.xlu0 %v193, 127
        %v218 = vpop.permute.xlu0 %217
        %219 = vrot.lane.b32.xlu0 %v194, 127
        %v220 = vpop.permute.xlu0 %219
        %221 = vrot.lane.b32.xlu0 %v195, 127
        %v222 = vpop.permute.xlu0 %221
        %223 = vrot.lane.b32.xlu0 %v196, 127
        %v224 = vpop.permute.xlu0 %223
        %225 = vrot.lane.b32.xlu0 %v197, 127
        %v226 = vpop.permute.xlu0 %225
        %227 = vrot.lane.b32.xlu0 %v198, 127
        %v228 = vpop.permute.xlu0 %227
        %229 = vrot.lane.b32.xlu0 %v199, 127
        %v230 = vpop.permute.xlu0 %229
        %231 = vrot.lane.b32.xlu0 %v200, 127
        %v232 = vpop.permute.xlu0 %231
        %233 = vrot.lane.b32.xlu0 %v201, 127
        %v234 = vpop.permute.xlu0 %233
        %235 = vrot.lane.b32.xlu0 %v202, 127
        %v236 = vpop.permute.xlu0 %235
        %237 = vrot.lane.b32.xlu0 %v203, 127
        %v238 = vpop.permute.xlu0 %237
        %239 = vrot.lane.b32.xlu0 %v204, 127
        %v240 = vpop.permute.xlu0 %239
        %v253 = vadd.f32 %v181, %v218
        %v254 = vadd.f32 %v182, %v220
        %v255 = vadd.f32 %v183, %v222
        %v256 = vadd.f32 %v184, %v224
        %v257 = vadd.f32 %v185, %v226
        %v258 = vadd.f32 %v186, %v228
        %v259 = vadd.f32 %v187, %v230
        %v260 = vadd.f32 %v188, %v232
        %v261 = vadd.f32 %v189, %v234
        %v262 = vadd.f32 %v190, %v236
        %v263 = vadd.f32 %v191, %v238
        %v264 = vadd.f32 %v192, %v240
        %277 = vrot.lane.b32.xlu0 %v181, 126
        %v278 = vpop.permute.xlu0 %277
        %279 = vrot.lane.b32.xlu0 %v182, 126
        %v280 = vpop.permute.xlu0 %279
        %281 = vrot.lane.b32.xlu0 %v183, 126
        %v282 = vpop.permute.xlu0 %281
        %283 = vrot.lane.b32.xlu0 %v184, 126
        %v284 = vpop.permute.xlu0 %283
        %285 = vrot.lane.b32.xlu0 %v185, 126
        %v286 = vpop.permute.xlu0 %285
        %287 = vrot.lane.b32.xlu0 %v186, 126
        %v288 = vpop.permute.xlu0 %287
        %289 = vrot.lane.b32.xlu0 %v187, 126
        %v290 = vpop.permute.xlu0 %289
        %291 = vrot.lane.b32.xlu0 %v188, 126
        %v292 = vpop.permute.xlu0 %291
        %293 = vrot.lane.b32.xlu0 %v189, 126
        %v294 = vpop.permute.xlu0 %293
        %295 = vrot.lane.b32.xlu0 %v190, 126
        %v296 = vpop.permute.xlu0 %295
        %297 = vrot.lane.b32.xlu0 %v191, 126
        %v298 = vpop.permute.xlu0 %297
        %299 = vrot.lane.b32.xlu0 %v192, 126
        %v300 = vpop.permute.xlu0 %299
        %v313 = vadd.f32 %v253, %v278
        %v314 = vadd.f32 %v254, %v280
        %v315 = vadd.f32 %v255, %v282
        %v316 = vadd.f32 %v256, %v284
        %v317 = vadd.f32 %v257, %v286
        %v318 = vadd.f32 %v258, %v288
        %v319 = vadd.f32 %v259, %v290
        %v320 = vadd.f32 %v260, %v292
        %v321 = vadd.f32 %v261, %v294
        %v322 = vadd.f32 %v262, %v296
        %v323 = vadd.f32 %v263, %v298
        %v324 = vadd.f32 %v264, %v300
        %vm325 = vcmask 1046528
        %v326 = vrot.slane %v193, 1
        %v327 = vrot.slane %v194, 1
        %v328 = vsel %vm325, %v326, %v327
        %v329 = vrot.slane %v195, 1
        %v330 = vsel %vm325, %v327, %v329
        %v331 = vrot.slane %v196, 1
        %v332 = vrot.slane %v197, 1
        %v333 = vsel %vm325, %v331, %v332
        %v334 = vrot.slane %v198, 1
        %v335 = vsel %vm325, %v332, %v334
        %v336 = vrot.slane %v199, 1
        %v337 = vrot.slane %v200, 1
        %v338 = vsel %vm325, %v336, %v337
        %v339 = vrot.slane %v201, 1
        %v340 = vsel %vm325, %v337, %v339
        %v341 = vrot.slane %v202, 1
        %v342 = vrot.slane %v203, 1
        %v343 = vsel %vm325, %v341, %v342
        %v344 = vrot.slane %v204, 1
        %v345 = vsel %vm325, %v342, %v344
        %v358 = vadd.f32 %v313, %v328
        %v359 = vadd.f32 %v314, %v330
        %v360 = vadd.f32 %v315, %v329
        %v361 = vadd.f32 %v316, %v333
        %v362 = vadd.f32 %v317, %v335
        %v363 = vadd.f32 %v318, %v334
        %v364 = vadd.f32 %v319, %v338
        %v365 = vadd.f32 %v320, %v340
        %v366 = vadd.f32 %v321, %v339
        %v367 = vadd.f32 %v322, %v343
        %v368 = vadd.f32 %v323, %v345
        %v369 = vadd.f32 %v324, %v344
        %v370 = vmul.f32 %v169, -1.0
        %v371 = vmul.f32 %v170, -1.0
        %v372 = vmul.f32 %v171, -1.0
        %v373 = vmul.f32 %v172, -1.0
        %v374 = vmul.f32 %v173, -1.0
        %v375 = vmul.f32 %v174, -1.0
        %v376 = vmul.f32 %v175, -1.0
        %v377 = vmul.f32 %v176, -1.0
        %v378 = vmul.f32 %v177, -1.0
        %v379 = vmul.f32 %v178, -1.0
        %v380 = vmul.f32 %v179, -1.0
        %v381 = vmul.f32 %v180, -1.0
        %v394 = vrot.slane %v370, 1
        %v395 = vrot.slane %v371, 1
        %v396 = vsel %vm325, %v394, %v395
        %v397 = vrot.slane %v372, 1
        %v398 = vsel %vm325, %v395, %v397
        %v399 = vrot.slane %v373, 1
        %v400 = vrot.slane %v374, 1
        %v401 = vsel %vm325, %v399, %v400
        %v402 = vrot.slane %v375, 1
        %v403 = vsel %vm325, %v400, %v402
        %v404 = vrot.slane %v376, 1
        %v405 = vrot.slane %v377, 1
        %v406 = vsel %vm325, %v404, %v405
        %v407 = vrot.slane %v378, 1
        %v408 = vsel %vm325, %v405, %v407
        %v409 = vrot.slane %v379, 1
        %v410 = vrot.slane %v380, 1
        %v411 = vsel %vm325, %v409, %v410
        %v412 = vrot.slane %v381, 1
        %v413 = vsel %vm325, %v410, %v412
        %414 = vrot.lane.b32.xlu0 %v396, 127
        %v415 = vpop.permute.xlu0 %414
        %416 = vrot.lane.b32.xlu0 %v398, 127
        %v417 = vpop.permute.xlu0 %416
        %418 = vrot.lane.b32.xlu0 %v397, 127
        %v419 = vpop.permute.xlu0 %418
        %420 = vrot.lane.b32.xlu0 %v401, 127
        %v421 = vpop.permute.xlu0 %420
        %422 = vrot.lane.b32.xlu0 %v403, 127
        %v423 = vpop.permute.xlu0 %422
        %424 = vrot.lane.b32.xlu0 %v402, 127
        %v425 = vpop.permute.xlu0 %424
        %426 = vrot.lane.b32.xlu0 %v406, 127
        %v427 = vpop.permute.xlu0 %426
        %428 = vrot.lane.b32.xlu0 %v408, 127
        %v429 = vpop.permute.xlu0 %428
        %430 = vrot.lane.b32.xlu0 %v407, 127
        %v431 = vpop.permute.xlu0 %430
        %432 = vrot.lane.b32.xlu0 %v411, 127
        %v433 = vpop.permute.xlu0 %432
        %434 = vrot.lane.b32.xlu0 %v413, 127
        %v435 = vpop.permute.xlu0 %434
        %436 = vrot.lane.b32.xlu0 %v412, 127
        %v437 = vpop.permute.xlu0 %436
        %v450 = vadd.f32 %v358, %v415
        %v451 = vadd.f32 %v359, %v417
        %v452 = vadd.f32 %v360, %v419
        %v453 = vadd.f32 %v361, %v421
        %v454 = vadd.f32 %v362, %v423
        %v455 = vadd.f32 %v363, %v425
        %v456 = vadd.f32 %v364, %v427
        %v457 = vadd.f32 %v365, %v429
        %v458 = vadd.f32 %v366, %v431
        %v459 = vadd.f32 %v367, %v433
        %v460 = vadd.f32 %v368, %v435
        %v461 = vadd.f32 %v369, %v437
        %462 = vrot.lane.b32.xlu0 %v328, 126
        %v463 = vpop.permute.xlu0 %462
        %464 = vrot.lane.b32.xlu0 %v330, 126
        %v465 = vpop.permute.xlu0 %464
        %466 = vrot.lane.b32.xlu0 %v329, 126
        %v467 = vpop.permute.xlu0 %466
        %468 = vrot.lane.b32.xlu0 %v333, 126
        %v469 = vpop.permute.xlu0 %468
        %470 = vrot.lane.b32.xlu0 %v335, 126
        %v471 = vpop.permute.xlu0 %470
        %472 = vrot.lane.b32.xlu0 %v334, 126
        %v473 = vpop.permute.xlu0 %472
        %474 = vrot.lane.b32.xlu0 %v338, 126
        %v475 = vpop.permute.xlu0 %474
        %476 = vrot.lane.b32.xlu0 %v340, 126
        %v477 = vpop.permute.xlu0 %476
        %478 = vrot.lane.b32.xlu0 %v339, 126
        %v479 = vpop.permute.xlu0 %478
        %480 = vrot.lane.b32.xlu0 %v343, 126
        %v481 = vpop.permute.xlu0 %480
        %482 = vrot.lane.b32.xlu0 %v345, 126
        %v483 = vpop.permute.xlu0 %482
        %484 = vrot.lane.b32.xlu0 %v344, 126
        %v485 = vpop.permute.xlu0 %484
        %v498 = vadd.f32 %v450, %v463
        %v499 = vadd.f32 %v451, %v465
        %v500 = vadd.f32 %v452, %v467
        %v501 = vadd.f32 %v453, %v469
        %v502 = vadd.f32 %v454, %v471
        %v503 = vadd.f32 %v455, %v473
        %v504 = vadd.f32 %v456, %v475
        %v505 = vadd.f32 %v457, %v477
        %v506 = vadd.f32 %v458, %v479
        %v507 = vadd.f32 %v459, %v481
        %v508 = vadd.f32 %v460, %v483
        %v509 = vadd.f32 %v461, %v485
        %vm510 = vcmask 1045504
        %v511 = vrot.slane %v181, 2
        %v512 = vrot.slane %v182, 2
        %v513 = vsel %vm510, %v511, %v512
        %v514 = vrot.slane %v183, 2
        %v515 = vsel %vm510, %v512, %v514
        %v516 = vrot.slane %v184, 2
        %v517 = vrot.slane %v185, 2
        %v518 = vsel %vm510, %v516, %v517
        %v519 = vrot.slane %v186, 2
        %v520 = vsel %vm510, %v517, %v519
        %v521 = vrot.slane %v187, 2
        %v522 = vrot.slane %v188, 2
        %v523 = vsel %vm510, %v521, %v522
        %v524 = vrot.slane %v189, 2
        %v525 = vsel %vm510, %v522, %v524
        %v526 = vrot.slane %v190, 2
        %v527 = vrot.slane %v191, 2
        %v528 = vsel %vm510, %v526, %v527
        %v529 = vrot.slane %v192, 2
        %v530 = vsel %vm510, %v527, %v529
        %v543 = vadd.f32 %v498, %v513
        %v544 = vadd.f32 %v499, %v515
        %v545 = vadd.f32 %v500, %v514
        %v546 = vadd.f32 %v501, %v518
        %v547 = vadd.f32 %v502, %v520
        %v548 = vadd.f32 %v503, %v519
        %v549 = vadd.f32 %v504, %v523
        %v550 = vadd.f32 %v505, %v525
        %v551 = vadd.f32 %v506, %v524
        %v552 = vadd.f32 %v507, %v528
        %v553 = vadd.f32 %v508, %v530
        %v554 = vadd.f32 %v509, %v529
        %v555 = vrot.slane %v193, 2
        %v556 = vrot.slane %v194, 2
        %v557 = vsel %vm510, %v555, %v556
        %v558 = vrot.slane %v195, 2
        %v559 = vsel %vm510, %v556, %v558
        %v560 = vrot.slane %v196, 2
        %v561 = vrot.slane %v197, 2
        %v562 = vsel %vm510, %v560, %v561
        %v563 = vrot.slane %v198, 2
        %v564 = vsel %vm510, %v561, %v563
        %v565 = vrot.slane %v199, 2
        %v566 = vrot.slane %v200, 2
        %v567 = vsel %vm510, %v565, %v566
        %v568 = vrot.slane %v201, 2
        %v569 = vsel %vm510, %v566, %v568
        %v570 = vrot.slane %v202, 2
        %v571 = vrot.slane %v203, 2
        %v572 = vsel %vm510, %v570, %v571
        %v573 = vrot.slane %v204, 2
        %v574 = vsel %vm510, %v571, %v573
        %575 = vrot.lane.b32.xlu0 %v557, 127
        %v576 = vpop.permute.xlu0 %575
        %577 = vrot.lane.b32.xlu0 %v559, 127
        %v578 = vpop.permute.xlu0 %577
        %579 = vrot.lane.b32.xlu0 %v558, 127
        %v580 = vpop.permute.xlu0 %579
        %581 = vrot.lane.b32.xlu0 %v562, 127
        %v582 = vpop.permute.xlu0 %581
        %583 = vrot.lane.b32.xlu0 %v564, 127
        %v584 = vpop.permute.xlu0 %583
        %585 = vrot.lane.b32.xlu0 %v563, 127
        %v586 = vpop.permute.xlu0 %585
        %587 = vrot.lane.b32.xlu0 %v567, 127
        %v588 = vpop.permute.xlu0 %587
        %589 = vrot.lane.b32.xlu0 %v569, 127
        %v590 = vpop.permute.xlu0 %589
        %591 = vrot.lane.b32.xlu0 %v568, 127
        %v592 = vpop.permute.xlu0 %591
        %593 = vrot.lane.b32.xlu0 %v572, 127
        %v594 = vpop.permute.xlu0 %593
        %595 = vrot.lane.b32.xlu0 %v574, 127
        %v596 = vpop.permute.xlu0 %595
        %597 = vrot.lane.b32.xlu0 %v573, 127
        %v598 = vpop.permute.xlu0 %597
        %v611 = vadd.f32 %v543, %v576
        %v612 = vadd.f32 %v544, %v578
        %v613 = vadd.f32 %v545, %v580
        %v614 = vadd.f32 %v546, %v582
        %v615 = vadd.f32 %v547, %v584
        %v616 = vadd.f32 %v548, %v586
        %v617 = vadd.f32 %v549, %v588
        %v618 = vadd.f32 %v550, %v590
        %v619 = vadd.f32 %v551, %v592
        %v620 = vadd.f32 %v552, %v594
        %v621 = vadd.f32 %v553, %v596
        %v622 = vadd.f32 %v554, %v598
        %623 = vrot.lane.b32.xlu0 %v513, 126
        %v624 = vpop.permute.xlu0 %623
        %625 = vrot.lane.b32.xlu0 %v515, 126
        %v626 = vpop.permute.xlu0 %625
        %627 = vrot.lane.b32.xlu0 %v514, 126
        %v628 = vpop.permute.xlu0 %627
        %629 = vrot.lane.b32.xlu0 %v518, 126
        %v630 = vpop.permute.xlu0 %629
        %631 = vrot.lane.b32.xlu0 %v520, 126
        %v632 = vpop.permute.xlu0 %631
        %633 = vrot.lane.b32.xlu0 %v519, 126
        %v634 = vpop.permute.xlu0 %633
        %635 = vrot.lane.b32.xlu0 %v523, 126
        %v636 = vpop.permute.xlu0 %635
        %637 = vrot.lane.b32.xlu0 %v525, 126
        %v638 = vpop.permute.xlu0 %637
        %639 = vrot.lane.b32.xlu0 %v524, 126
        %v640 = vpop.permute.xlu0 %639
        %641 = vrot.lane.b32.xlu0 %v528, 126
        %v642 = vpop.permute.xlu0 %641
        %643 = vrot.lane.b32.xlu0 %v530, 126
        %v644 = vpop.permute.xlu0 %643
        %645 = vrot.lane.b32.xlu0 %v529, 126
        %v646 = vpop.permute.xlu0 %645
        %v659 = vadd.f32 %v611, %v624
        %v660 = vadd.f32 %v612, %v626
        %v661 = vadd.f32 %v613, %v628
        %v662 = vadd.f32 %v614, %v630
        %v663 = vadd.f32 %v615, %v632
        %v664 = vadd.f32 %v616, %v634
        %v665 = vadd.f32 %v617, %v636
        %v666 = vadd.f32 %v618, %v638
        %v667 = vadd.f32 %v619, %v640
        %v668 = vadd.f32 %v620, %v642
        %v669 = vadd.f32 %v621, %v644
        %v670 = vadd.f32 %v622, %v646
        %v671 = vmax.f32 %v659, -3.0
        %v672 = vmax.f32 %v660, -3.0
        %v673 = vmax.f32 %v661, -3.0
        %v674 = vmax.f32 %v662, -3.0
        %v675 = vmax.f32 %v663, -3.0
        %v676 = vmax.f32 %v664, -3.0
        %v677 = vmax.f32 %v665, -3.0
        %v678 = vmax.f32 %v666, -3.0
        %v679 = vmax.f32 %v667, -3.0
        %v680 = vmax.f32 %v668, -3.0
        %v681 = vmax.f32 %v669, -3.0
        %v682 = vmax.f32 %v670, -3.0
        %v683 = vmin.f32 %v671, 3.0
        %v684 = vmin.f32 %v672, 3.0
        %v685 = vmin.f32 %v673, 3.0
        %v686 = vmin.f32 %v674, 3.0
        %v687 = vmin.f32 %v675, 3.0
        %v688 = vmin.f32 %v676, 3.0
        %v689 = vmin.f32 %v677, 3.0
        %v690 = vmin.f32 %v678, 3.0
        %v691 = vmin.f32 %v679, 3.0
        %v692 = vmin.f32 %v680, 3.0
        %v693 = vmin.f32 %v681, 3.0
        %v694 = vmin.f32 %v682, 3.0
        %v695 = vmul.f32 %v169, -0.083333336
        %v696 = vmul.f32 %v170, -0.083333336
        %v697 = vmul.f32 %v172, -0.083333336
        %v698 = vmul.f32 %v173, -0.083333336
        %v699 = vmul.f32 %v175, -0.083333336
        %v700 = vmul.f32 %v176, -0.083333336
        %v701 = vmul.f32 %v178, -0.083333336
        %v702 = vmul.f32 %v179, -0.083333336
        %v703 = vmul.f32 %v169, 0.16666667
        %v704 = vmul.f32 %v170, 0.16666667
        %v705 = vmul.f32 %v172, 0.16666667
        %v706 = vmul.f32 %v173, 0.16666667
        %v707 = vmul.f32 %v175, 0.16666667
        %v708 = vmul.f32 %v176, 0.16666667
        %v709 = vmul.f32 %v178, 0.16666667
        %v710 = vmul.f32 %v179, 0.16666667
        %719 = vrot.lane.b32.xlu0 %v703, 127
        %v720 = vpop.permute.xlu0 %719
        %721 = vrot.lane.b32.xlu0 %v704, 127
        %v722 = vpop.permute.xlu0 %721
        %723 = vrot.lane.b32.xlu0 %v705, 127
        %v724 = vpop.permute.xlu0 %723
        %725 = vrot.lane.b32.xlu0 %v706, 127
        %v726 = vpop.permute.xlu0 %725
        %727 = vrot.lane.b32.xlu0 %v707, 127
        %v728 = vpop.permute.xlu0 %727
        %729 = vrot.lane.b32.xlu0 %v708, 127
        %v730 = vpop.permute.xlu0 %729
        %731 = vrot.lane.b32.xlu0 %v709, 127
        %v732 = vpop.permute.xlu0 %731
        %733 = vrot.lane.b32.xlu0 %v710, 127
        %v734 = vpop.permute.xlu0 %733
        %v743 = vadd.f32 %v695, %v720
        %v744 = vadd.f32 %v696, %v722
        %v745 = vadd.f32 %v697, %v724
        %v746 = vadd.f32 %v698, %v726
        %v747 = vadd.f32 %v699, %v728
        %v748 = vadd.f32 %v700, %v730
        %v749 = vadd.f32 %v701, %v732
        %v750 = vadd.f32 %v702, %v734
        %v751 = vmul.f32 %v169, -0.16666667
        %v752 = vmul.f32 %v170, -0.16666667
        %v753 = vmul.f32 %v172, -0.16666667
        %v754 = vmul.f32 %v173, -0.16666667
        %v755 = vmul.f32 %v175, -0.16666667
        %v756 = vmul.f32 %v176, -0.16666667
        %v757 = vmul.f32 %v178, -0.16666667
        %v758 = vmul.f32 %v179, -0.16666667
        %767 = vrot.lane.b32.xlu0 %v751, 126
        %v768 = vpop.permute.xlu0 %767
        %769 = vrot.lane.b32.xlu0 %v752, 126
        %v770 = vpop.permute.xlu0 %769
        %771 = vrot.lane.b32.xlu0 %v753, 126
        %v772 = vpop.permute.xlu0 %771
        %773 = vrot.lane.b32.xlu0 %v754, 126
        %v774 = vpop.permute.xlu0 %773
        %775 = vrot.lane.b32.xlu0 %v755, 126
        %v776 = vpop.permute.xlu0 %775
        %777 = vrot.lane.b32.xlu0 %v756, 126
        %v778 = vpop.permute.xlu0 %777
        %779 = vrot.lane.b32.xlu0 %v757, 126
        %v780 = vpop.permute.xlu0 %779
        %781 = vrot.lane.b32.xlu0 %v758, 126
        %v782 = vpop.permute.xlu0 %781
        %v791 = vadd.f32 %v743, %v768
        %v792 = vadd.f32 %v744, %v770
        %v793 = vadd.f32 %v745, %v772
        %v794 = vadd.f32 %v746, %v774
        %v795 = vadd.f32 %v747, %v776
        %v796 = vadd.f32 %v748, %v778
        %v797 = vadd.f32 %v749, %v780
        %v798 = vadd.f32 %v750, %v782
        %799 = vrot.lane.b32.xlu0 %v703, 125
        %v800 = vpop.permute.xlu0 %799
        %801 = vrot.lane.b32.xlu0 %v704, 125
        %v802 = vpop.permute.xlu0 %801
        %803 = vrot.lane.b32.xlu0 %v705, 125
        %v804 = vpop.permute.xlu0 %803
        %805 = vrot.lane.b32.xlu0 %v706, 125
        %v806 = vpop.permute.xlu0 %805
        %807 = vrot.lane.b32.xlu0 %v707, 125
        %v808 = vpop.permute.xlu0 %807
        %809 = vrot.lane.b32.xlu0 %v708, 125
        %v810 = vpop.permute.xlu0 %809
        %811 = vrot.lane.b32.xlu0 %v709, 125
        %v812 = vpop.permute.xlu0 %811
        %813 = vrot.lane.b32.xlu0 %v710, 125
        %v814 = vpop.permute.xlu0 %813
        %v823 = vadd.f32 %v791, %v800
        %v824 = vadd.f32 %v792, %v802
        %v825 = vadd.f32 %v793, %v804
        %v826 = vadd.f32 %v794, %v806
        %v827 = vadd.f32 %v795, %v808
        %v828 = vadd.f32 %v796, %v810
        %v829 = vadd.f32 %v797, %v812
        %v830 = vadd.f32 %v798, %v814
        %839 = vrot.lane.b32.xlu0 %v695, 124
        %v840 = vpop.permute.xlu0 %839
        %841 = vrot.lane.b32.xlu0 %v696, 124
        %v842 = vpop.permute.xlu0 %841
        %843 = vrot.lane.b32.xlu0 %v697, 124
        %v844 = vpop.permute.xlu0 %843
        %845 = vrot.lane.b32.xlu0 %v698, 124
        %v846 = vpop.permute.xlu0 %845
        %847 = vrot.lane.b32.xlu0 %v699, 124
        %v848 = vpop.permute.xlu0 %847
        %849 = vrot.lane.b32.xlu0 %v700, 124
        %v850 = vpop.permute.xlu0 %849
        %851 = vrot.lane.b32.xlu0 %v701, 124
        %v852 = vpop.permute.xlu0 %851
        %853 = vrot.lane.b32.xlu0 %v702, 124
        %v854 = vpop.permute.xlu0 %853
        %v863 = vadd.f32 %v823, %v840
        %v864 = vadd.f32 %v824, %v842
        %v865 = vadd.f32 %v825, %v844
        %v866 = vadd.f32 %v826, %v846
        %v867 = vadd.f32 %v827, %v848
        %v868 = vadd.f32 %v828, %v850
        %v869 = vadd.f32 %v829, %v852
        %v870 = vadd.f32 %v830, %v854
        %v871 = vmul.f32 %v171, 0.16666667
        %v872 = vmul.f32 %v174, 0.16666667
        %v873 = vmul.f32 %v177, 0.16666667
        %v874 = vmul.f32 %v180, 0.16666667
        %v879 = vrot.slane %v703, 1
        %v880 = vrot.slane %v704, 1
        %v881 = vsel %vm325, %v879, %v880
        %v882 = vrot.slane %v871, 1
        %v883 = vsel %vm325, %v880, %v882
        %v884 = vrot.slane %v705, 1
        %v885 = vrot.slane %v706, 1
        %v886 = vsel %vm325, %v884, %v885
        %v887 = vrot.slane %v872, 1
        %v888 = vsel %vm325, %v885, %v887
        %v889 = vrot.slane %v707, 1
        %v890 = vrot.slane %v708, 1
        %v891 = vsel %vm325, %v889, %v890
        %v892 = vrot.slane %v873, 1
        %v893 = vsel %vm325, %v890, %v892
        %v894 = vrot.slane %v709, 1
        %v895 = vrot.slane %v710, 1
        %v896 = vsel %vm325, %v894, %v895
        %v897 = vrot.slane %v874, 1
        %v898 = vsel %vm325, %v895, %v897
        %v907 = vadd.f32 %v863, %v881
        %v908 = vadd.f32 %v864, %v883
        %v909 = vadd.f32 %v865, %v886
        %v910 = vadd.f32 %v866, %v888
        %v911 = vadd.f32 %v867, %v891
        %v912 = vadd.f32 %v868, %v893
        %v913 = vadd.f32 %v869, %v896
        %v914 = vadd.f32 %v870, %v898
        %v915 = vmul.f32 %v169, -0.5
        %v916 = vmul.f32 %v170, -0.5
        %v917 = vmul.f32 %v171, -0.5
        %v918 = vmul.f32 %v172, -0.5
        %v919 = vmul.f32 %v173, -0.5
        %v920 = vmul.f32 %v174, -0.5
        %v921 = vmul.f32 %v175, -0.5
        %v922 = vmul.f32 %v176, -0.5
        %v923 = vmul.f32 %v177, -0.5
        %v924 = vmul.f32 %v178, -0.5
        %v925 = vmul.f32 %v179, -0.5
        %v926 = vmul.f32 %v180, -0.5
        %v939 = vrot.slane %v915, 1
        %v940 = vrot.slane %v916, 1
        %v941 = vsel %vm325, %v939, %v940
        %v942 = vrot.slane %v917, 1
        %v943 = vsel %vm325, %v940, %v942
        %v944 = vrot.slane %v918, 1
        %v945 = vrot.slane %v919, 1
        %v946 = vsel %vm325, %v944, %v945
        %v947 = vrot.slane %v920, 1
        %v948 = vsel %vm325, %v945, %v947
        %v949 = vrot.slane %v921, 1
        %v950 = vrot.slane %v922, 1
        %v951 = vsel %vm325, %v949, %v950
        %v952 = vrot.slane %v923, 1
        %v953 = vsel %vm325, %v950, %v952
        %v954 = vrot.slane %v924, 1
        %v955 = vrot.slane %v925, 1
        %v956 = vsel %vm325, %v954, %v955
        %v957 = vrot.slane %v926, 1
        %v958 = vsel %vm325, %v955, %v957
        %959 = vrot.lane.b32.xlu0 %v941, 127
        %v960 = vpop.permute.xlu0 %959
        %961 = vrot.lane.b32.xlu0 %v943, 127
        %v962 = vpop.permute.xlu0 %961
        %963 = vrot.lane.b32.xlu0 %v946, 127
        %v964 = vpop.permute.xlu0 %963
        %965 = vrot.lane.b32.xlu0 %v948, 127
        %v966 = vpop.permute.xlu0 %965
        %967 = vrot.lane.b32.xlu0 %v951, 127
        %v968 = vpop.permute.xlu0 %967
        %969 = vrot.lane.b32.xlu0 %v953, 127
        %v970 = vpop.permute.xlu0 %969
        %971 = vrot.lane.b32.xlu0 %v956, 127
        %v972 = vpop.permute.xlu0 %971
        %973 = vrot.lane.b32.xlu0 %v958, 127
        %v974 = vpop.permute.xlu0 %973
        %v983 = vadd.f32 %v907, %v960
        %v984 = vadd.f32 %v908, %v962
        %v985 = vadd.f32 %v909, %v964
        %v986 = vadd.f32 %v910, %v966
        %v987 = vadd.f32 %v911, %v968
        %v988 = vadd.f32 %v912, %v970
        %v989 = vadd.f32 %v913, %v972
        %v990 = vadd.f32 %v914, %v974
        %v991 = vmul.f32 %v169, 0.6666667
        %v992 = vmul.f32 %v170, 0.6666667
        %v993 = vmul.f32 %v171, 0.6666667
        %v994 = vmul.f32 %v172, 0.6666667
        %v995 = vmul.f32 %v173, 0.6666667
        %v996 = vmul.f32 %v174, 0.6666667
        %v997 = vmul.f32 %v175, 0.6666667
        %v998 = vmul.f32 %v176, 0.6666667
        %v999 = vmul.f32 %v177, 0.6666667
        %v1000 = vmul.f32 %v178, 0.6666667
        %v1001 = vmul.f32 %v179, 0.6666667
        %v1002 = vmul.f32 %v180, 0.6666667
        %v1015 = vrot.slane %v991, 1
        %v1016 = vrot.slane %v992, 1
        %v1017 = vsel %vm325, %v1015, %v1016
        %v1018 = vrot.slane %v993, 1
        %v1019 = vsel %vm325, %v1016, %v1018
        %v1020 = vrot.slane %v994, 1
        %v1021 = vrot.slane %v995, 1
        %v1022 = vsel %vm325, %v1020, %v1021
        %v1023 = vrot.slane %v996, 1
        %v1024 = vsel %vm325, %v1021, %v1023
        %v1025 = vrot.slane %v997, 1
        %v1026 = vrot.slane %v998, 1
        %v1027 = vsel %vm325, %v1025, %v1026
        %v1028 = vrot.slane %v999, 1
        %v1029 = vsel %vm325, %v1026, %v1028
        %v1030 = vrot.slane %v1000, 1
        %v1031 = vrot.slane %v1001, 1
        %v1032 = vsel %vm325, %v1030, %v1031
        %v1033 = vrot.slane %v1002, 1
        %v1034 = vsel %vm325, %v1031, %v1033
        %1035 = vrot.lane.b32.xlu0 %v1017, 126
        %v1036 = vpop.permute.xlu0 %1035
        %1037 = vrot.lane.b32.xlu0 %v1019, 126
        %v1038 = vpop.permute.xlu0 %1037
        %1039 = vrot.lane.b32.xlu0 %v1022, 126
        %v1040 = vpop.permute.xlu0 %1039
        %1041 = vrot.lane.b32.xlu0 %v1024, 126
        %v1042 = vpop.permute.xlu0 %1041
        %1043 = vrot.lane.b32.xlu0 %v1027, 126
        %v1044 = vpop.permute.xlu0 %1043
        %1045 = vrot.lane.b32.xlu0 %v1029, 126
        %v1046 = vpop.permute.xlu0 %1045
        %1047 = vrot.lane.b32.xlu0 %v1032, 126
        %v1048 = vpop.permute.xlu0 %1047
        %1049 = vrot.lane.b32.xlu0 %v1034, 126
        %v1050 = vpop.permute.xlu0 %1049
        %v1059 = vadd.f32 %v983, %v1036
        %v1060 = vadd.f32 %v984, %v1038
        %v1061 = vadd.f32 %v985, %v1040
        %v1062 = vadd.f32 %v986, %v1042
        %v1063 = vadd.f32 %v987, %v1044
        %v1064 = vadd.f32 %v988, %v1046
        %v1065 = vadd.f32 %v989, %v1048
        %v1066 = vadd.f32 %v990, %v1050
        %1067 = vrot.lane.b32.xlu0 %v941, 125
        %v1068 = vpop.permute.xlu0 %1067
        %1069 = vrot.lane.b32.xlu0 %v943, 125
        %v1070 = vpop.permute.xlu0 %1069
        %1071 = vrot.lane.b32.xlu0 %v946, 125
        %v1072 = vpop.permute.xlu0 %1071
        %1073 = vrot.lane.b32.xlu0 %v948, 125
        %v1074 = vpop.permute.xlu0 %1073
        %1075 = vrot.lane.b32.xlu0 %v951, 125
        %v1076 = vpop.permute.xlu0 %1075
        %1077 = vrot.lane.b32.xlu0 %v953, 125
        %v1078 = vpop.permute.xlu0 %1077
        %1079 = vrot.lane.b32.xlu0 %v956, 125
        %v1080 = vpop.permute.xlu0 %1079
        %1081 = vrot.lane.b32.xlu0 %v958, 125
        %v1082 = vpop.permute.xlu0 %1081
        %v1091 = vadd.f32 %v1059, %v1068
        %v1092 = vadd.f32 %v1060, %v1070
        %v1093 = vadd.f32 %v1061, %v1072
        %v1094 = vadd.f32 %v1062, %v1074
        %v1095 = vadd.f32 %v1063, %v1076
        %v1096 = vadd.f32 %v1064, %v1078
        %v1097 = vadd.f32 %v1065, %v1080
        %v1098 = vadd.f32 %v1066, %v1082
        %1099 = vrot.lane.b32.xlu0 %v881, 124
        %v1100 = vpop.permute.xlu0 %1099
        %1101 = vrot.lane.b32.xlu0 %v883, 124
        %v1102 = vpop.permute.xlu0 %1101
        %1103 = vrot.lane.b32.xlu0 %v886, 124
        %v1104 = vpop.permute.xlu0 %1103
        %1105 = vrot.lane.b32.xlu0 %v888, 124
        %v1106 = vpop.permute.xlu0 %1105
        %1107 = vrot.lane.b32.xlu0 %v891, 124
        %v1108 = vpop.permute.xlu0 %1107
        %1109 = vrot.lane.b32.xlu0 %v893, 124
        %v1110 = vpop.permute.xlu0 %1109
        %1111 = vrot.lane.b32.xlu0 %v896, 124
        %v1112 = vpop.permute.xlu0 %1111
        %1113 = vrot.lane.b32.xlu0 %v898, 124
        %v1114 = vpop.permute.xlu0 %1113
        %v1123 = vadd.f32 %v1091, %v1100
        %v1124 = vadd.f32 %v1092, %v1102
        %v1125 = vadd.f32 %v1093, %v1104
        %v1126 = vadd.f32 %v1094, %v1106
        %v1127 = vadd.f32 %v1095, %v1108
        %v1128 = vadd.f32 %v1096, %v1110
        %v1129 = vadd.f32 %v1097, %v1112
        %v1130 = vadd.f32 %v1098, %v1114
        %v1131 = vmul.f32 %v171, -0.16666667
        %v1132 = vmul.f32 %v174, -0.16666667
        %v1133 = vmul.f32 %v177, -0.16666667
        %v1134 = vmul.f32 %v180, -0.16666667
        %v1139 = vrot.slane %v751, 2
        %v1140 = vrot.slane %v752, 2
        %v1141 = vsel %vm510, %v1139, %v1140
        %v1142 = vrot.slane %v1131, 2
        %v1143 = vsel %vm510, %v1140, %v1142
        %v1144 = vrot.slane %v753, 2
        %v1145 = vrot.slane %v754, 2
        %v1146 = vsel %vm510, %v1144, %v1145
        %v1147 = vrot.slane %v1132, 2
        %v1148 = vsel %vm510, %v1145, %v1147
        %v1149 = vrot.slane %v755, 2
        %v1150 = vrot.slane %v756, 2
        %v1151 = vsel %vm510, %v1149, %v1150
        %v1152 = vrot.slane %v1133, 2
        %v1153 = vsel %vm510, %v1150, %v1152
        %v1154 = vrot.slane %v757, 2
        %v1155 = vrot.slane %v758, 2
        %v1156 = vsel %vm510, %v1154, %v1155
        %v1157 = vrot.slane %v1134, 2
        %v1158 = vsel %vm510, %v1155, %v1157
        %v1167 = vadd.f32 %v1123, %v1141
        %v1168 = vadd.f32 %v1124, %v1143
        %v1169 = vadd.f32 %v1125, %v1146
        %v1170 = vadd.f32 %v1126, %v1148
        %v1171 = vadd.f32 %v1127, %v1151
        %v1172 = vadd.f32 %v1128, %v1153
        %v1173 = vadd.f32 %v1129, %v1156
        %v1174 = vadd.f32 %v1130, %v1158
        %v1175 = vrot.slane %v991, 2
        %v1176 = vrot.slane %v992, 2
        %v1177 = vsel %vm510, %v1175, %v1176
        %v1178 = vrot.slane %v993, 2
        %v1179 = vsel %vm510, %v1176, %v1178
        %v1180 = vrot.slane %v994, 2
        %v1181 = vrot.slane %v995, 2
        %v1182 = vsel %vm510, %v1180, %v1181
        %v1183 = vrot.slane %v996, 2
        %v1184 = vsel %vm510, %v1181, %v1183
        %v1185 = vrot.slane %v997, 2
        %v1186 = vrot.slane %v998, 2
        %v1187 = vsel %vm510, %v1185, %v1186
        %v1188 = vrot.slane %v999, 2
        %v1189 = vsel %vm510, %v1186, %v1188
        %v1190 = vrot.slane %v1000, 2
        %v1191 = vrot.slane %v1001, 2
        %v1192 = vsel %vm510, %v1190, %v1191
        %v1193 = vrot.slane %v1002, 2
        %v1194 = vsel %vm510, %v1191, %v1193
        %1195 = vrot.lane.b32.xlu0 %v1177, 127
        %v1196 = vpop.permute.xlu0 %1195
        %1197 = vrot.lane.b32.xlu0 %v1179, 127
        %v1198 = vpop.permute.xlu0 %1197
        %1199 = vrot.lane.b32.xlu0 %v1182, 127
        %v1200 = vpop.permute.xlu0 %1199
        %1201 = vrot.lane.b32.xlu0 %v1184, 127
        %v1202 = vpop.permute.xlu0 %1201
        %1203 = vrot.lane.b32.xlu0 %v1187, 127
        %v1204 = vpop.permute.xlu0 %1203
        %1205 = vrot.lane.b32.xlu0 %v1189, 127
        %v1206 = vpop.permute.xlu0 %1205
        %1207 = vrot.lane.b32.xlu0 %v1192, 127
        %v1208 = vpop.permute.xlu0 %1207
        %1209 = vrot.lane.b32.xlu0 %v1194, 127
        %v1210 = vpop.permute.xlu0 %1209
        %v1219 = vadd.f32 %v1167, %v1196
        %v1220 = vadd.f32 %v1168, %v1198
        %v1221 = vadd.f32 %v1169, %v1200
        %v1222 = vadd.f32 %v1170, %v1202
        %v1223 = vadd.f32 %v1171, %v1204
        %v1224 = vadd.f32 %v1172, %v1206
        %v1225 = vadd.f32 %v1173, %v1208
        %v1226 = vadd.f32 %v1174, %v1210
        %v1227 = vrot.slane %v370, 2
        %v1228 = vrot.slane %v371, 2
        %v1229 = vsel %vm510, %v1227, %v1228
        %v1230 = vrot.slane %v372, 2
        %v1231 = vsel %vm510, %v1228, %v1230
        %v1232 = vrot.slane %v373, 2
        %v1233 = vrot.slane %v374, 2
        %v1234 = vsel %vm510, %v1232, %v1233
        %v1235 = vrot.slane %v375, 2
        %v1236 = vsel %vm510, %v1233, %v1235
        %v1237 = vrot.slane %v376, 2
        %v1238 = vrot.slane %v377, 2
        %v1239 = vsel %vm510, %v1237, %v1238
        %v1240 = vrot.slane %v378, 2
        %v1241 = vsel %vm510, %v1238, %v1240
        %v1242 = vrot.slane %v379, 2
        %v1243 = vrot.slane %v380, 2
        %v1244 = vsel %vm510, %v1242, %v1243
        %v1245 = vrot.slane %v381, 2
        %v1246 = vsel %vm510, %v1243, %v1245
        %1247 = vrot.lane.b32.xlu0 %v1229, 126
        %v1248 = vpop.permute.xlu0 %1247
        %1249 = vrot.lane.b32.xlu0 %v1231, 126
        %v1250 = vpop.permute.xlu0 %1249
        %1251 = vrot.lane.b32.xlu0 %v1234, 126
        %v1252 = vpop.permute.xlu0 %1251
        %1253 = vrot.lane.b32.xlu0 %v1236, 126
        %v1254 = vpop.permute.xlu0 %1253
        %1255 = vrot.lane.b32.xlu0 %v1239, 126
        %v1256 = vpop.permute.xlu0 %1255
        %1257 = vrot.lane.b32.xlu0 %v1241, 126
        %v1258 = vpop.permute.xlu0 %1257
        %1259 = vrot.lane.b32.xlu0 %v1244, 126
        %v1260 = vpop.permute.xlu0 %1259
        %1261 = vrot.lane.b32.xlu0 %v1246, 126
        %v1262 = vpop.permute.xlu0 %1261
        %v1271 = vadd.f32 %v1219, %v1248
        %v1272 = vadd.f32 %v1220, %v1250
        %v1273 = vadd.f32 %v1221, %v1252
        %v1274 = vadd.f32 %v1222, %v1254
        %v1275 = vadd.f32 %v1223, %v1256
        %v1276 = vadd.f32 %v1224, %v1258
        %v1277 = vadd.f32 %v1225, %v1260
        %v1278 = vadd.f32 %v1226, %v1262
        %1279 = vrot.lane.b32.xlu0 %v1177, 125
        %v1280 = vpop.permute.xlu0 %1279
        %1281 = vrot.lane.b32.xlu0 %v1179, 125
        %v1282 = vpop.permute.xlu0 %1281
        %1283 = vrot.lane.b32.xlu0 %v1182, 125
        %v1284 = vpop.permute.xlu0 %1283
        %1285 = vrot.lane.b32.xlu0 %v1184, 125
        %v1286 = vpop.permute.xlu0 %1285
        %1287 = vrot.lane.b32.xlu0 %v1187, 125
        %v1288 = vpop.permute.xlu0 %1287
        %1289 = vrot.lane.b32.xlu0 %v1189, 125
        %v1290 = vpop.permute.xlu0 %1289
        %1291 = vrot.lane.b32.xlu0 %v1192, 125
        %v1292 = vpop.permute.xlu0 %1291
        %1293 = vrot.lane.b32.xlu0 %v1194, 125
        %v1294 = vpop.permute.xlu0 %1293
        %v1303 = vadd.f32 %v1271, %v1280
        %v1304 = vadd.f32 %v1272, %v1282
        %v1305 = vadd.f32 %v1273, %v1284
        %v1306 = vadd.f32 %v1274, %v1286
        %v1307 = vadd.f32 %v1275, %v1288
        %v1308 = vadd.f32 %v1276, %v1290
        %v1309 = vadd.f32 %v1277, %v1292
        %v1310 = vadd.f32 %v1278, %v1294
        %1311 = vrot.lane.b32.xlu0 %v1141, 124
        %v1312 = vpop.permute.xlu0 %1311
        %1313 = vrot.lane.b32.xlu0 %v1143, 124
        %v1314 = vpop.permute.xlu0 %1313
        %1315 = vrot.lane.b32.xlu0 %v1146, 124
        %v1316 = vpop.permute.xlu0 %1315
        %1317 = vrot.lane.b32.xlu0 %v1148, 124
        %v1318 = vpop.permute.xlu0 %1317
        %1319 = vrot.lane.b32.xlu0 %v1151, 124
        %v1320 = vpop.permute.xlu0 %1319
        %1321 = vrot.lane.b32.xlu0 %v1153, 124
        %v1322 = vpop.permute.xlu0 %1321
        %1323 = vrot.lane.b32.xlu0 %v1156, 124
        %v1324 = vpop.permute.xlu0 %1323
        %1325 = vrot.lane.b32.xlu0 %v1158, 124
        %v1326 = vpop.permute.xlu0 %1325
        %v1335 = vadd.f32 %v1303, %v1312
        %v1336 = vadd.f32 %v1304, %v1314
        %v1337 = vadd.f32 %v1305, %v1316
        %v1338 = vadd.f32 %v1306, %v1318
        %v1339 = vadd.f32 %v1307, %v1320
        %v1340 = vadd.f32 %v1308, %v1322
        %v1341 = vadd.f32 %v1309, %v1324
        %v1342 = vadd.f32 %v1310, %v1326
        %vm1343 = vcmask 1044480
        %v1344 = vrot.slane %v703, 3
        %v1345 = vrot.slane %v704, 3
        %v1346 = vsel %vm1343, %v1344, %v1345
        %v1347 = vrot.slane %v871, 3
        %v1348 = vsel %vm1343, %v1345, %v1347
        %v1349 = vrot.slane %v705, 3
        %v1350 = vrot.slane %v706, 3
        %v1351 = vsel %vm1343, %v1349, %v1350
        %v1352 = vrot.slane %v872, 3
        %v1353 = vsel %vm1343, %v1350, %v1352
        %v1354 = vrot.slane %v707, 3
        %v1355 = vrot.slane %v708, 3
        %v1356 = vsel %vm1343, %v1354, %v1355
        %v1357 = vrot.slane %v873, 3
        %v1358 = vsel %vm1343, %v1355, %v1357
        %v1359 = vrot.slane %v709, 3
        %v1360 = vrot.slane %v710, 3
        %v1361 = vsel %vm1343, %v1359, %v1360
        %v1362 = vrot.slane %v874, 3
        %v1363 = vsel %vm1343, %v1360, %v1362
        %v1372 = vadd.f32 %v1335, %v1346
        %v1373 = vadd.f32 %v1336, %v1348
        %v1374 = vadd.f32 %v1337, %v1351
        %v1375 = vadd.f32 %v1338, %v1353
        %v1376 = vadd.f32 %v1339, %v1356
        %v1377 = vadd.f32 %v1340, %v1358
        %v1378 = vadd.f32 %v1341, %v1361
        %v1379 = vadd.f32 %v1342, %v1363
        %v1380 = vrot.slane %v915, 3
        %v1381 = vrot.slane %v916, 3
        %v1382 = vsel %vm1343, %v1380, %v1381
        %v1383 = vrot.slane %v917, 3
        %v1384 = vsel %vm1343, %v1381, %v1383
        %v1385 = vrot.slane %v918, 3
        %v1386 = vrot.slane %v919, 3
        %v1387 = vsel %vm1343, %v1385, %v1386
        %v1388 = vrot.slane %v920, 3
        %v1389 = vsel %vm1343, %v1386, %v1388
        %v1390 = vrot.slane %v921, 3
        %v1391 = vrot.slane %v922, 3
        %v1392 = vsel %vm1343, %v1390, %v1391
        %v1393 = vrot.slane %v923, 3
        %v1394 = vsel %vm1343, %v1391, %v1393
        %v1395 = vrot.slane %v924, 3
        %v1396 = vrot.slane %v925, 3
        %v1397 = vsel %vm1343, %v1395, %v1396
        %v1398 = vrot.slane %v926, 3
        %v1399 = vsel %vm1343, %v1396, %v1398
        %1400 = vrot.lane.b32.xlu0 %v1382, 127
        %v1401 = vpop.permute.xlu0 %1400
        %1402 = vrot.lane.b32.xlu0 %v1384, 127
        %v1403 = vpop.permute.xlu0 %1402
        %1404 = vrot.lane.b32.xlu0 %v1387, 127
        %v1405 = vpop.permute.xlu0 %1404
        %1406 = vrot.lane.b32.xlu0 %v1389, 127
        %v1407 = vpop.permute.xlu0 %1406
        %1408 = vrot.lane.b32.xlu0 %v1392, 127
        %v1409 = vpop.permute.xlu0 %1408
        %1410 = vrot.lane.b32.xlu0 %v1394, 127
        %v1411 = vpop.permute.xlu0 %1410
        %1412 = vrot.lane.b32.xlu0 %v1397, 127
        %v1413 = vpop.permute.xlu0 %1412
        %1414 = vrot.lane.b32.xlu0 %v1399, 127
        %v1415 = vpop.permute.xlu0 %1414
        %v1424 = vadd.f32 %v1372, %v1401
        %v1425 = vadd.f32 %v1373, %v1403
        %v1426 = vadd.f32 %v1374, %v1405
        %v1427 = vadd.f32 %v1375, %v1407
        %v1428 = vadd.f32 %v1376, %v1409
        %v1429 = vadd.f32 %v1377, %v1411
        %v1430 = vadd.f32 %v1378, %v1413
        %v1431 = vadd.f32 %v1379, %v1415
        %v1432 = vrot.slane %v991, 3
        %v1433 = vrot.slane %v992, 3
        %v1434 = vsel %vm1343, %v1432, %v1433
        %v1435 = vrot.slane %v993, 3
        %v1436 = vsel %vm1343, %v1433, %v1435
        %v1437 = vrot.slane %v994, 3
        %v1438 = vrot.slane %v995, 3
        %v1439 = vsel %vm1343, %v1437, %v1438
        %v1440 = vrot.slane %v996, 3
        %v1441 = vsel %vm1343, %v1438, %v1440
        %v1442 = vrot.slane %v997, 3
        %v1443 = vrot.slane %v998, 3
        %v1444 = vsel %vm1343, %v1442, %v1443
        %v1445 = vrot.slane %v999, 3
        %v1446 = vsel %vm1343, %v1443, %v1445
        %v1447 = vrot.slane %v1000, 3
        %v1448 = vrot.slane %v1001, 3
        %v1449 = vsel %vm1343, %v1447, %v1448
        %v1450 = vrot.slane %v1002, 3
        %v1451 = vsel %vm1343, %v1448, %v1450
        %1452 = vrot.lane.b32.xlu0 %v1434, 126
        %v1453 = vpop.permute.xlu0 %1452
        %1454 = vrot.lane.b32.xlu0 %v1436, 126
        %v1455 = vpop.permute.xlu0 %1454
        %1456 = vrot.lane.b32.xlu0 %v1439, 126
        %v1457 = vpop.permute.xlu0 %1456
        %1458 = vrot.lane.b32.xlu0 %v1441, 126
        %v1459 = vpop.permute.xlu0 %1458
        %1460 = vrot.lane.b32.xlu0 %v1444, 126
        %v1461 = vpop.permute.xlu0 %1460
        %1462 = vrot.lane.b32.xlu0 %v1446, 126
        %v1463 = vpop.permute.xlu0 %1462
        %1464 = vrot.lane.b32.xlu0 %v1449, 126
        %v1465 = vpop.permute.xlu0 %1464
        %1466 = vrot.lane.b32.xlu0 %v1451, 126
        %v1467 = vpop.permute.xlu0 %1466
        %v1476 = vadd.f32 %v1424, %v1453
        %v1477 = vadd.f32 %v1425, %v1455
        %v1478 = vadd.f32 %v1426, %v1457
        %v1479 = vadd.f32 %v1427, %v1459
        %v1480 = vadd.f32 %v1428, %v1461
        %v1481 = vadd.f32 %v1429, %v1463
        %v1482 = vadd.f32 %v1430, %v1465
        %v1483 = vadd.f32 %v1431, %v1467
        %1484 = vrot.lane.b32.xlu0 %v1382, 125
        %v1485 = vpop.permute.xlu0 %1484
        %1486 = vrot.lane.b32.xlu0 %v1384, 125
        %v1487 = vpop.permute.xlu0 %1486
        %1488 = vrot.lane.b32.xlu0 %v1387, 125
        %v1489 = vpop.permute.xlu0 %1488
        %1490 = vrot.lane.b32.xlu0 %v1389, 125
        %v1491 = vpop.permute.xlu0 %1490
        %1492 = vrot.lane.b32.xlu0 %v1392, 125
        %v1493 = vpop.permute.xlu0 %1492
        %1494 = vrot.lane.b32.xlu0 %v1394, 125
        %v1495 = vpop.permute.xlu0 %1494
        %1496 = vrot.lane.b32.xlu0 %v1397, 125
        %v1497 = vpop.permute.xlu0 %1496
        %1498 = vrot.lane.b32.xlu0 %v1399, 125
        %v1499 = vpop.permute.xlu0 %1498
        %v1508 = vadd.f32 %v1476, %v1485
        %v1509 = vadd.f32 %v1477, %v1487
        %v1510 = vadd.f32 %v1478, %v1489
        %v1511 = vadd.f32 %v1479, %v1491
        %v1512 = vadd.f32 %v1480, %v1493
        %v1513 = vadd.f32 %v1481, %v1495
        %v1514 = vadd.f32 %v1482, %v1497
        %v1515 = vadd.f32 %v1483, %v1499
        %1516 = vrot.lane.b32.xlu0 %v1346, 124
        %v1517 = vpop.permute.xlu0 %1516
        %1518 = vrot.lane.b32.xlu0 %v1348, 124
        %v1519 = vpop.permute.xlu0 %1518
        %1520 = vrot.lane.b32.xlu0 %v1351, 124
        %v1521 = vpop.permute.xlu0 %1520
        %1522 = vrot.lane.b32.xlu0 %v1353, 124
        %v1523 = vpop.permute.xlu0 %1522
        %1524 = vrot.lane.b32.xlu0 %v1356, 124
        %v1525 = vpop.permute.xlu0 %1524
        %1526 = vrot.lane.b32.xlu0 %v1358, 124
        %v1527 = vpop.permute.xlu0 %1526
        %1528 = vrot.lane.b32.xlu0 %v1361, 124
        %v1529 = vpop.permute.xlu0 %1528
        %1530 = vrot.lane.b32.xlu0 %v1363, 124
        %v1531 = vpop.permute.xlu0 %1530
        %v1540 = vadd.f32 %v1508, %v1517
        %v1541 = vadd.f32 %v1509, %v1519
        %v1542 = vadd.f32 %v1510, %v1521
        %v1543 = vadd.f32 %v1511, %v1523
        %v1544 = vadd.f32 %v1512, %v1525
        %v1545 = vadd.f32 %v1513, %v1527
        %v1546 = vadd.f32 %v1514, %v1529
        %v1547 = vadd.f32 %v1515, %v1531
        %v1548 = vmul.f32 %v171, -0.083333336
        %v1549 = vmul.f32 %v174, -0.083333336
        %v1550 = vmul.f32 %v177, -0.083333336
        %v1551 = vmul.f32 %v180, -0.083333336
        %vm1556 = vcmask 1043456
        %v1557 = vrot.slane %v695, 4
        %v1558 = vrot.slane %v696, 4
        %v1559 = vsel %vm1556, %v1557, %v1558
        %v1560 = vrot.slane %v1548, 4
        %v1561 = vsel %vm1556, %v1558, %v1560
        %v1562 = vrot.slane %v697, 4
        %v1563 = vrot.slane %v698, 4
        %v1564 = vsel %vm1556, %v1562, %v1563
        %v1565 = vrot.slane %v1549, 4
        %v1566 = vsel %vm1556, %v1563, %v1565
        %v1567 = vrot.slane %v699, 4
        %v1568 = vrot.slane %v700, 4
        %v1569 = vsel %vm1556, %v1567, %v1568
        %v1570 = vrot.slane %v1550, 4
        %v1571 = vsel %vm1556, %v1568, %v1570
        %v1572 = vrot.slane %v701, 4
        %v1573 = vrot.slane %v702, 4
        %v1574 = vsel %vm1556, %v1572, %v1573
        %v1575 = vrot.slane %v1551, 4
        %v1576 = vsel %vm1556, %v1573, %v1575
        %v1585 = vadd.f32 %v1540, %v1559
        %v1586 = vadd.f32 %v1541, %v1561
        %v1587 = vadd.f32 %v1542, %v1564
        %v1588 = vadd.f32 %v1543, %v1566
        %v1589 = vadd.f32 %v1544, %v1569
        %v1590 = vadd.f32 %v1545, %v1571
        %v1591 = vadd.f32 %v1546, %v1574
        %v1592 = vadd.f32 %v1547, %v1576
        %v1593 = vrot.slane %v703, 4
        %v1594 = vrot.slane %v704, 4
        %v1595 = vsel %vm1556, %v1593, %v1594
        %v1596 = vrot.slane %v871, 4
        %v1597 = vsel %vm1556, %v1594, %v1596
        %v1598 = vrot.slane %v705, 4
        %v1599 = vrot.slane %v706, 4
        %v1600 = vsel %vm1556, %v1598, %v1599
        %v1601 = vrot.slane %v872, 4
        %v1602 = vsel %vm1556, %v1599, %v1601
        %v1603 = vrot.slane %v707, 4
        %v1604 = vrot.slane %v708, 4
        %v1605 = vsel %vm1556, %v1603, %v1604
        %v1606 = vrot.slane %v873, 4
        %v1607 = vsel %vm1556, %v1604, %v1606
        %v1608 = vrot.slane %v709, 4
        %v1609 = vrot.slane %v710, 4
        %v1610 = vsel %vm1556, %v1608, %v1609
        %v1611 = vrot.slane %v874, 4
        %v1612 = vsel %vm1556, %v1609, %v1611
        %1613 = vrot.lane.b32.xlu0 %v1595, 127
        %v1614 = vpop.permute.xlu0 %1613
        %1615 = vrot.lane.b32.xlu0 %v1597, 127
        %v1616 = vpop.permute.xlu0 %1615
        %1617 = vrot.lane.b32.xlu0 %v1600, 127
        %v1618 = vpop.permute.xlu0 %1617
        %1619 = vrot.lane.b32.xlu0 %v1602, 127
        %v1620 = vpop.permute.xlu0 %1619
        %1621 = vrot.lane.b32.xlu0 %v1605, 127
        %v1622 = vpop.permute.xlu0 %1621
        %1623 = vrot.lane.b32.xlu0 %v1607, 127
        %v1624 = vpop.permute.xlu0 %1623
        %1625 = vrot.lane.b32.xlu0 %v1610, 127
        %v1626 = vpop.permute.xlu0 %1625
        %1627 = vrot.lane.b32.xlu0 %v1612, 127
        %v1628 = vpop.permute.xlu0 %1627
        %v1637 = vadd.f32 %v1585, %v1614
        %v1638 = vadd.f32 %v1586, %v1616
        %v1639 = vadd.f32 %v1587, %v1618
        %v1640 = vadd.f32 %v1588, %v1620
        %v1641 = vadd.f32 %v1589, %v1622
        %v1642 = vadd.f32 %v1590, %v1624
        %v1643 = vadd.f32 %v1591, %v1626
        %v1644 = vadd.f32 %v1592, %v1628
        %v1645 = vrot.slane %v751, 4
        %v1646 = vrot.slane %v752, 4
        %v1647 = vsel %vm1556, %v1645, %v1646
        %v1648 = vrot.slane %v1131, 4
        %v1649 = vsel %vm1556, %v1646, %v1648
        %v1650 = vrot.slane %v753, 4
        %v1651 = vrot.slane %v754, 4
        %v1652 = vsel %vm1556, %v1650, %v1651
        %v1653 = vrot.slane %v1132, 4
        %v1654 = vsel %vm1556, %v1651, %v1653
        %v1655 = vrot.slane %v755, 4
        %v1656 = vrot.slane %v756, 4
        %v1657 = vsel %vm1556, %v1655, %v1656
        %v1658 = vrot.slane %v1133, 4
        %v1659 = vsel %vm1556, %v1656, %v1658
        %v1660 = vrot.slane %v757, 4
        %v1661 = vrot.slane %v758, 4
        %v1662 = vsel %vm1556, %v1660, %v1661
        %v1663 = vrot.slane %v1134, 4
        %v1664 = vsel %vm1556, %v1661, %v1663
        %1665 = vrot.lane.b32.xlu0 %v1647, 126
        %v1666 = vpop.permute.xlu0 %1665
        %1667 = vrot.lane.b32.xlu0 %v1649, 126
        %v1668 = vpop.permute.xlu0 %1667
        %1669 = vrot.lane.b32.xlu0 %v1652, 126
        %v1670 = vpop.permute.xlu0 %1669
        %1671 = vrot.lane.b32.xlu0 %v1654, 126
        %v1672 = vpop.permute.xlu0 %1671
        %1673 = vrot.lane.b32.xlu0 %v1657, 126
        %v1674 = vpop.permute.xlu0 %1673
        %1675 = vrot.lane.b32.xlu0 %v1659, 126
        %v1676 = vpop.permute.xlu0 %1675
        %1677 = vrot.lane.b32.xlu0 %v1662, 126
        %v1678 = vpop.permute.xlu0 %1677
        %1679 = vrot.lane.b32.xlu0 %v1664, 126
        %v1680 = vpop.permute.xlu0 %1679
        %v1689 = vadd.f32 %v1637, %v1666
        %v1690 = vadd.f32 %v1638, %v1668
        %v1691 = vadd.f32 %v1639, %v1670
        %v1692 = vadd.f32 %v1640, %v1672
        %v1693 = vadd.f32 %v1641, %v1674
        %v1694 = vadd.f32 %v1642, %v1676
        %v1695 = vadd.f32 %v1643, %v1678
        %v1696 = vadd.f32 %v1644, %v1680
        %1697 = vrot.lane.b32.xlu0 %v1595, 125
        %v1698 = vpop.permute.xlu0 %1697
        %1699 = vrot.lane.b32.xlu0 %v1597, 125
        %v1700 = vpop.permute.xlu0 %1699
        %1701 = vrot.lane.b32.xlu0 %v1600, 125
        %v1702 = vpop.permute.xlu0 %1701
        %1703 = vrot.lane.b32.xlu0 %v1602, 125
        %v1704 = vpop.permute.xlu0 %1703
        %1705 = vrot.lane.b32.xlu0 %v1605, 125
        %v1706 = vpop.permute.xlu0 %1705
        %1707 = vrot.lane.b32.xlu0 %v1607, 125
        %v1708 = vpop.permute.xlu0 %1707
        %1709 = vrot.lane.b32.xlu0 %v1610, 125
        %v1710 = vpop.permute.xlu0 %1709
        %1711 = vrot.lane.b32.xlu0 %v1612, 125
        %v1712 = vpop.permute.xlu0 %1711
        %v1721 = vadd.f32 %v1689, %v1698
        %v1722 = vadd.f32 %v1690, %v1700
        %v1723 = vadd.f32 %v1691, %v1702
        %v1724 = vadd.f32 %v1692, %v1704
        %v1725 = vadd.f32 %v1693, %v1706
        %v1726 = vadd.f32 %v1694, %v1708
        %v1727 = vadd.f32 %v1695, %v1710
        %v1728 = vadd.f32 %v1696, %v1712
        %1729 = vrot.lane.b32.xlu0 %v1559, 124
        %v1730 = vpop.permute.xlu0 %1729
        %1731 = vrot.lane.b32.xlu0 %v1561, 124
        %v1732 = vpop.permute.xlu0 %1731
        %1733 = vrot.lane.b32.xlu0 %v1564, 124
        %v1734 = vpop.permute.xlu0 %1733
        %1735 = vrot.lane.b32.xlu0 %v1566, 124
        %v1736 = vpop.permute.xlu0 %1735
        %1737 = vrot.lane.b32.xlu0 %v1569, 124
        %v1738 = vpop.permute.xlu0 %1737
        %1739 = vrot.lane.b32.xlu0 %v1571, 124
        %v1740 = vpop.permute.xlu0 %1739
        %1741 = vrot.lane.b32.xlu0 %v1574, 124
        %v1742 = vpop.permute.xlu0 %1741
        %1743 = vrot.lane.b32.xlu0 %v1576, 124
        %v1744 = vpop.permute.xlu0 %1743
        %v1753 = vadd.f32 %v1721, %v1730
        %v1754 = vadd.f32 %v1722, %v1732
        %v1755 = vadd.f32 %v1723, %v1734
        %v1756 = vadd.f32 %v1724, %v1736
        %v1757 = vadd.f32 %v1725, %v1738
        %v1758 = vadd.f32 %v1726, %v1740
        %v1759 = vadd.f32 %v1727, %v1742
        %v1760 = vadd.f32 %v1728, %v1744
        %v1761 = vmax.f32 %v1753, -3.0
        %v1762 = vmax.f32 %v1754, -3.0
        %v1763 = vmax.f32 %v1755, -3.0
        %v1764 = vmax.f32 %v1756, -3.0
        %v1765 = vmax.f32 %v1757, -3.0
        %v1766 = vmax.f32 %v1758, -3.0
        %v1767 = vmax.f32 %v1759, -3.0
        %v1768 = vmax.f32 %v1760, -3.0
        %v1769 = vmin.f32 %v1761, 3.0
        %v1770 = vmin.f32 %v1762, 3.0
        %v1771 = vmin.f32 %v1763, 3.0
        %v1772 = vmin.f32 %v1764, 3.0
        %v1773 = vmin.f32 %v1765, 3.0
        %v1774 = vmin.f32 %v1766, 3.0
        %v1775 = vmin.f32 %v1767, 3.0
        %v1776 = vmin.f32 %v1768, 3.0
        %1777 = vrot.lane.b32.xlu0 %v370, 127
        %v1778 = vpop.permute.xlu0 %1777
        %1779 = vrot.lane.b32.xlu0 %v371, 127
        %v1780 = vpop.permute.xlu0 %1779
        %1781 = vrot.lane.b32.xlu0 %v372, 127
        %v1782 = vpop.permute.xlu0 %1781
        %1783 = vrot.lane.b32.xlu0 %v373, 127
        %v1784 = vpop.permute.xlu0 %1783
        %1785 = vrot.lane.b32.xlu0 %v374, 127
        %v1786 = vpop.permute.xlu0 %1785
        %1787 = vrot.lane.b32.xlu0 %v375, 127
        %v1788 = vpop.permute.xlu0 %1787
        %1789 = vrot.lane.b32.xlu0 %v376, 127
        %v1790 = vpop.permute.xlu0 %1789
        %1791 = vrot.lane.b32.xlu0 %v377, 127
        %v1792 = vpop.permute.xlu0 %1791
        %1793 = vrot.lane.b32.xlu0 %v378, 127
        %v1794 = vpop.permute.xlu0 %1793
        %1795 = vrot.lane.b32.xlu0 %v379, 127
        %v1796 = vpop.permute.xlu0 %1795
        %1797 = vrot.lane.b32.xlu0 %v380, 127
        %v1798 = vpop.permute.xlu0 %1797
        %1799 = vrot.lane.b32.xlu0 %v381, 127
        %v1800 = vpop.permute.xlu0 %1799
        %v1813 = vadd.f32 %v193, %v1778
        %v1814 = vadd.f32 %v194, %v1780
        %v1815 = vadd.f32 %v195, %v1782
        %v1816 = vadd.f32 %v196, %v1784
        %v1817 = vadd.f32 %v197, %v1786
        %v1818 = vadd.f32 %v198, %v1788
        %v1819 = vadd.f32 %v199, %v1790
        %v1820 = vadd.f32 %v200, %v1792
        %v1821 = vadd.f32 %v201, %v1794
        %v1822 = vadd.f32 %v202, %v1796
        %v1823 = vadd.f32 %v203, %v1798
        %v1824 = vadd.f32 %v204, %v1800
        %1825 = vrot.lane.b32.xlu0 %v193, 126
        %v1826 = vpop.permute.xlu0 %1825
        %1827 = vrot.lane.b32.xlu0 %v194, 126
        %v1828 = vpop.permute.xlu0 %1827
        %1829 = vrot.lane.b32.xlu0 %v195, 126
        %v1830 = vpop.permute.xlu0 %1829
        %1831 = vrot.lane.b32.xlu0 %v196, 126
        %v1832 = vpop.permute.xlu0 %1831
        %1833 = vrot.lane.b32.xlu0 %v197, 126
        %v1834 = vpop.permute.xlu0 %1833
        %1835 = vrot.lane.b32.xlu0 %v198, 126
        %v1836 = vpop.permute.xlu0 %1835
        %1837 = vrot.lane.b32.xlu0 %v199, 126
        %v1838 = vpop.permute.xlu0 %1837
        %1839 = vrot.lane.b32.xlu0 %v200, 126
        %v1840 = vpop.permute.xlu0 %1839
        %1841 = vrot.lane.b32.xlu0 %v201, 126
        %v1842 = vpop.permute.xlu0 %1841
        %1843 = vrot.lane.b32.xlu0 %v202, 126
        %v1844 = vpop.permute.xlu0 %1843
        %1845 = vrot.lane.b32.xlu0 %v203, 126
        %v1846 = vpop.permute.xlu0 %1845
        %1847 = vrot.lane.b32.xlu0 %v204, 126
        %v1848 = vpop.permute.xlu0 %1847
        %v1861 = vadd.f32 %v1813, %v1826
        %v1862 = vadd.f32 %v1814, %v1828
        %v1863 = vadd.f32 %v1815, %v1830
        %v1864 = vadd.f32 %v1816, %v1832
        %v1865 = vadd.f32 %v1817, %v1834
        %v1866 = vadd.f32 %v1818, %v1836
        %v1867 = vadd.f32 %v1819, %v1838
        %v1868 = vadd.f32 %v1820, %v1840
        %v1869 = vadd.f32 %v1821, %v1842
        %v1870 = vadd.f32 %v1822, %v1844
        %v1871 = vadd.f32 %v1823, %v1846
        %v1872 = vadd.f32 %v1824, %v1848
        %v1873 = vmax.f32 %v1861, -3.0
        %v1874 = vmax.f32 %v1862, -3.0
        %v1875 = vmax.f32 %v1863, -3.0
        %v1876 = vmax.f32 %v1864, -3.0
        %v1877 = vmax.f32 %v1865, -3.0
        %v1878 = vmax.f32 %v1866, -3.0
        %v1879 = vmax.f32 %v1867, -3.0
        %v1880 = vmax.f32 %v1868, -3.0
        %v1881 = vmax.f32 %v1869, -3.0
        %v1882 = vmax.f32 %v1870, -3.0
        %v1883 = vmax.f32 %v1871, -3.0
        %v1884 = vmax.f32 %v1872, -3.0
        %v1885 = vmin.f32 %v1873, 3.0
        %v1886 = vmin.f32 %v1874, 3.0
        %v1887 = vmin.f32 %v1875, 3.0
        %v1888 = vmin.f32 %v1876, 3.0
        %v1889 = vmin.f32 %v1877, 3.0
        %v1890 = vmin.f32 %v1878, 3.0
        %v1891 = vmin.f32 %v1879, 3.0
        %v1892 = vmin.f32 %v1880, 3.0
        %v1893 = vmin.f32 %v1881, 3.0
        %v1894 = vmin.f32 %v1882, 3.0
        %v1895 = vmin.f32 %v1883, 3.0
        %v1896 = vmin.f32 %v1884, 3.0
        %vm1905 = vcmask 1040384
        %v1906 = vrot.slane %v1769, 7
        %v1907 = vrot.slane %v1770, 7
        %v1908 = vsel %vm1905, %v1906, %v1907
        %v1909 = vrot.slane %v1771, 7
        %v1910 = vrot.slane %v1772, 7
        %v1911 = vsel %vm1905, %v1909, %v1910
        %v1912 = vrot.slane %v1773, 7
        %v1913 = vrot.slane %v1774, 7
        %v1914 = vsel %vm1905, %v1912, %v1913
        %v1915 = vrot.slane %v1775, 7
        %v1916 = vrot.slane %v1776, 7
        %v1917 = vsel %vm1905, %v1915, %v1916
        %1918 = vrot.lane.b32.xlu0 %v1906, 1
        %v1919 = vpop.permute.xlu0 %1918
        %1920 = vrot.lane.b32.xlu0 %v1908, 1
        %v1921 = vpop.permute.xlu0 %1920
        %1922 = vrot.lane.b32.xlu0 %v1907, 1
        %v1923 = vpop.permute.xlu0 %1922
        %1924 = vrot.lane.b32.xlu0 %v1909, 1
        %v1925 = vpop.permute.xlu0 %1924
        %1926 = vrot.lane.b32.xlu0 %v1911, 1
        %v1927 = vpop.permute.xlu0 %1926
        %1928 = vrot.lane.b32.xlu0 %v1910, 1
        %v1929 = vpop.permute.xlu0 %1928
        %1930 = vrot.lane.b32.xlu0 %v1912, 1
        %v1931 = vpop.permute.xlu0 %1930
        %1932 = vrot.lane.b32.xlu0 %v1914, 1
        %v1933 = vpop.permute.xlu0 %1932
        %1934 = vrot.lane.b32.xlu0 %v1913, 1
        %v1935 = vpop.permute.xlu0 %1934
        %1936 = vrot.lane.b32.xlu0 %v1915, 1
        %v1937 = vpop.permute.xlu0 %1936
        %1938 = vrot.lane.b32.xlu0 %v1917, 1
        %v1939 = vpop.permute.xlu0 %1938
        %1940 = vrot.lane.b32.xlu0 %v1916, 1
        %v1941 = vpop.permute.xlu0 %1940
        %v1954 = vrot.slane %v1885, 1
        %v1955 = vrot.slane %v1886, 1
        %v1956 = vsel %vm325, %v1954, %v1955
        %v1957 = vrot.slane %v1887, 1
        %v1958 = vsel %vm325, %v1955, %v1957
        %v1959 = vrot.slane %v1888, 1
        %v1960 = vrot.slane %v1889, 1
        %v1961 = vsel %vm325, %v1959, %v1960
        %v1962 = vrot.slane %v1890, 1
        %v1963 = vsel %vm325, %v1960, %v1962
        %v1964 = vrot.slane %v1891, 1
        %v1965 = vrot.slane %v1892, 1
        %v1966 = vsel %vm325, %v1964, %v1965
        %v1967 = vrot.slane %v1893, 1
        %v1968 = vsel %vm325, %v1965, %v1967
        %v1969 = vrot.slane %v1894, 1
        %v1970 = vrot.slane %v1895, 1
        %v1971 = vsel %vm325, %v1969, %v1970
        %v1972 = vrot.slane %v1896, 1
        %v1973 = vsel %vm325, %v1970, %v1972
        %v1986 = vrot.slane %v683, 1
        %v1987 = vrot.slane %v684, 1
        %v1988 = vsel %vm325, %v1986, %v1987
        %v1989 = vrot.slane %v685, 1
        %v1990 = vsel %vm325, %v1987, %v1989
        %v1991 = vrot.slane %v686, 1
        %v1992 = vrot.slane %v687, 1
        %v1993 = vsel %vm325, %v1991, %v1992
        %v1994 = vrot.slane %v688, 1
        %v1995 = vsel %vm325, %v1992, %v1994
        %v1996 = vrot.slane %v689, 1
        %v1997 = vrot.slane %v690, 1
        %v1998 = vsel %vm325, %v1996, %v1997
        %v1999 = vrot.slane %v691, 1
        %v2000 = vsel %vm325, %v1997, %v1999
        %v2001 = vrot.slane %v692, 1
        %v2002 = vrot.slane %v693, 1
        %v2003 = vsel %vm325, %v2001, %v2002
        %v2004 = vrot.slane %v694, 1
        %v2005 = vsel %vm325, %v2002, %v2004
        %v2006 = vrot.slane %v1919, 1
        %v2007 = vrot.slane %v1921, 1
        %v2008 = vsel %vm325, %v2006, %v2007
        %v2009 = vrot.slane %v1923, 1
        %v2010 = vsel %vm325, %v2007, %v2009
        %v2011 = vrot.slane %v1925, 1
        %v2012 = vrot.slane %v1927, 1
        %v2013 = vsel %vm325, %v2011, %v2012
        %v2014 = vrot.slane %v1929, 1
        %v2015 = vsel %vm325, %v2012, %v2014
        %v2016 = vrot.slane %v1931, 1
        %v2017 = vrot.slane %v1933, 1
        %v2018 = vsel %vm325, %v2016, %v2017
        %v2019 = vrot.slane %v1935, 1
        %v2020 = vsel %vm325, %v2017, %v2019
        %v2021 = vrot.slane %v1937, 1
        %v2022 = vrot.slane %v1939, 1
        %v2023 = vsel %vm325, %v2021, %v2022
        %v2024 = vrot.slane %v1941, 1
        %v2025 = vsel %vm325, %v2022, %v2024
        %v2026 = vrot.slane %v1956, 1
        %v2027 = vrot.slane %v1958, 1
        %v2028 = vsel %vm325, %v2026, %v2027
        %v2029 = vrot.slane %v1957, 1
        %v2030 = vsel %vm325, %v2027, %v2029
        %v2031 = vrot.slane %v1961, 1
        %v2032 = vrot.slane %v1963, 1
        %v2033 = vsel %vm325, %v2031, %v2032
        %v2034 = vrot.slane %v1962, 1
        %v2035 = vsel %vm325, %v2032, %v2034
        %v2036 = vrot.slane %v1966, 1
        %v2037 = vrot.slane %v1968, 1
        %v2038 = vsel %vm325, %v2036, %v2037
        %v2039 = vrot.slane %v1967, 1
        %v2040 = vsel %vm325, %v2037, %v2039
        %v2041 = vrot.slane %v1971, 1
        %v2042 = vrot.slane %v1973, 1
        %v2043 = vsel %vm325, %v2041, %v2042
        %v2044 = vrot.slane %v1972, 1
        %v2045 = vsel %vm325, %v2042, %v2044
        %2046 = vrot.lane.b32.xlu0 %v1988, 127
        %v2047 = vpop.permute.xlu0 %2046
        %2048 = vrot.lane.b32.xlu0 %v1990, 127
        %v2049 = vpop.permute.xlu0 %2048
        %2050 = vrot.lane.b32.xlu0 %v1993, 127
        %v2051 = vpop.permute.xlu0 %2050
        %2052 = vrot.lane.b32.xlu0 %v1995, 127
        %v2053 = vpop.permute.xlu0 %2052
        %2054 = vrot.lane.b32.xlu0 %v1998, 127
        %v2055 = vpop.permute.xlu0 %2054
        %2056 = vrot.lane.b32.xlu0 %v2000, 127
        %v2057 = vpop.permute.xlu0 %2056
        %2058 = vrot.lane.b32.xlu0 %v2003, 127
        %v2059 = vpop.permute.xlu0 %2058
        %2060 = vrot.lane.b32.xlu0 %v2005, 127
        %v2061 = vpop.permute.xlu0 %2060
        %2062 = vrot.lane.b32.xlu0 %v2008, 127
        %v2063 = vpop.permute.xlu0 %2062
        %2064 = vrot.lane.b32.xlu0 %v2010, 127
        %v2065 = vpop.permute.xlu0 %2064
        %2066 = vrot.lane.b32.xlu0 %v2013, 127
        %v2067 = vpop.permute.xlu0 %2066
        %2068 = vrot.lane.b32.xlu0 %v2015, 127
        %v2069 = vpop.permute.xlu0 %2068
        %2070 = vrot.lane.b32.xlu0 %v2018, 127
        %v2071 = vpop.permute.xlu0 %2070
        %2072 = vrot.lane.b32.xlu0 %v2020, 127
        %v2073 = vpop.permute.xlu0 %2072
        %2074 = vrot.lane.b32.xlu0 %v2023, 127
        %v2075 = vpop.permute.xlu0 %2074
        %2076 = vrot.lane.b32.xlu0 %v2025, 127
        %v2077 = vpop.permute.xlu0 %2076
        %2078 = vrot.lane.b32.xlu0 %v2028, 127
        %v2079 = vpop.permute.xlu0 %2078
        %2080 = vrot.lane.b32.xlu0 %v2030, 127
        %v2081 = vpop.permute.xlu0 %2080
        %2082 = vrot.lane.b32.xlu0 %v2033, 127
        %v2083 = vpop.permute.xlu0 %2082
        %2084 = vrot.lane.b32.xlu0 %v2035, 127
        %v2085 = vpop.permute.xlu0 %2084
        %2086 = vrot.lane.b32.xlu0 %v2038, 127
        %v2087 = vpop.permute.xlu0 %2086
        %2088 = vrot.lane.b32.xlu0 %v2040, 127
        %v2089 = vpop.permute.xlu0 %2088
        %2090 = vrot.lane.b32.xlu0 %v2043, 127
        %v2091 = vpop.permute.xlu0 %2090
        %2092 = vrot.lane.b32.xlu0 %v2045, 127
        %v2093 = vpop.permute.xlu0 %2092
        %v2118 = vcombine.low %v2047, %v2055
        %v2119 = vcombine.high %v2047, %v2055
        %v2121 = vunpack.c.l.s4 1983009808
        %v2122 = vunpack.c.0.s8 %v2121
        %v2123 = vlaneseq
        %v2124 = vshrl.u32 %v2123, 7
        %v2125 = vsub.s32 %v2122, %v2124
        %v2126 = vrot.slane %v2118, %v2125
        %v2128 = vunpack.c.l.s4 1983009808
        %v2129 = vunpack.c.0.s8 %v2128
        %v2130 = vlaneseq
        %v2131 = vshrl.u32 %v2130, 7
        %v2132 = vsub.s32 %v2129, %v2131
        %v2133 = vrot.slane %v2119, %v2132
        %v2134 = vcombine.low %v2051, %v2059
        %v2135 = vcombine.high %v2051, %v2059
        %v2137 = vunpack.c.l.s4 1983009808
        %v2138 = vunpack.c.0.s8 %v2137
        %v2139 = vlaneseq
        %v2140 = vshrl.u32 %v2139, 7
        %v2141 = vsub.s32 %v2138, %v2140
        %v2142 = vrot.slane %v2134, %v2141
        %v2144 = vunpack.c.l.s4 1983009808
        %v2145 = vunpack.c.0.s8 %v2144
        %v2146 = vlaneseq
        %v2147 = vshrl.u32 %v2146, 7
        %v2148 = vsub.s32 %v2145, %v2147
        %v2149 = vrot.slane %v2135, %v2148
        %v2150 = vcombine.low %v2063, %v2071
        %v2151 = vcombine.high %v2063, %v2071
        %v2153 = vunpack.c.l.s4 1983009808
        %v2154 = vunpack.c.0.s8 %v2153
        %v2155 = vlaneseq
        %v2156 = vshrl.u32 %v2155, 7
        %v2157 = vsub.s32 %v2154, %v2156
        %v2158 = vrot.slane %v2150, %v2157
        %v2160 = vunpack.c.l.s4 1983009808
        %v2161 = vunpack.c.0.s8 %v2160
        %v2162 = vlaneseq
        %v2163 = vshrl.u32 %v2162, 7
        %v2164 = vsub.s32 %v2161, %v2163
        %v2165 = vrot.slane %v2151, %v2164
        %v2166 = vcombine.low %v2067, %v2075
        %v2167 = vcombine.high %v2067, %v2075
        %v2169 = vunpack.c.l.s4 1983009808
        %v2170 = vunpack.c.0.s8 %v2169
        %v2171 = vlaneseq
        %v2172 = vshrl.u32 %v2171, 7
        %v2173 = vsub.s32 %v2170, %v2172
        %v2174 = vrot.slane %v2166, %v2173
        %v2176 = vunpack.c.l.s4 1983009808
        %v2177 = vunpack.c.0.s8 %v2176
        %v2178 = vlaneseq
        %v2179 = vshrl.u32 %v2178, 7
        %v2180 = vsub.s32 %v2177, %v2179
        %v2181 = vrot.slane %v2167, %v2180
        %v2182 = vcombine.low %v2126, %v2142
        %v2183 = vcombine.high %v2126, %v2142
        %v2185 = vunpack.c.l.s4 1934713408
        %v2186 = vunpack.c.0.s8 %v2185
        %v2187 = vlaneseq
        %v2188 = vshrl.u32 %v2187, 7
        %v2189 = vsub.s32 %v2186, %v2188
        %v2190 = vrot.slane %v2182, %v2189
        %v2192 = vunpack.c.l.s4 1934713408
        %v2193 = vunpack.c.0.s8 %v2192
        %v2194 = vlaneseq
        %v2195 = vshrl.u32 %v2194, 7
        %v2196 = vsub.s32 %v2193, %v2195
        %v2197 = vrot.slane %v2183, %v2196
        %v2198 = vcombine.low %v2133, %v2149
        %v2199 = vcombine.high %v2133, %v2149
        %v2201 = vunpack.c.l.s4 1934713408
        %v2202 = vunpack.c.0.s8 %v2201
        %v2203 = vlaneseq
        %v2204 = vshrl.u32 %v2203, 7
        %v2205 = vsub.s32 %v2202, %v2204
        %v2206 = vrot.slane %v2198, %v2205
        %v2208 = vunpack.c.l.s4 1934713408
        %v2209 = vunpack.c.0.s8 %v2208
        %v2210 = vlaneseq
        %v2211 = vshrl.u32 %v2210, 7
        %v2212 = vsub.s32 %v2209, %v2211
        %v2213 = vrot.slane %v2199, %v2212
        %v2214 = vcombine.low %v2158, %v2174
        %v2215 = vcombine.high %v2158, %v2174
        %v2217 = vunpack.c.l.s4 1934713408
        %v2218 = vunpack.c.0.s8 %v2217
        %v2219 = vlaneseq
        %v2220 = vshrl.u32 %v2219, 7
        %v2221 = vsub.s32 %v2218, %v2220
        %v2222 = vrot.slane %v2214, %v2221
        %v2224 = vunpack.c.l.s4 1934713408
        %v2225 = vunpack.c.0.s8 %v2224
        %v2226 = vlaneseq
        %v2227 = vshrl.u32 %v2226, 7
        %v2228 = vsub.s32 %v2225, %v2227
        %v2229 = vrot.slane %v2215, %v2228
        %v2230 = vcombine.low %v2165, %v2181
        %v2231 = vcombine.high %v2165, %v2181
        %v2233 = vunpack.c.l.s4 1934713408
        %v2234 = vunpack.c.0.s8 %v2233
        %v2235 = vlaneseq
        %v2236 = vshrl.u32 %v2235, 7
        %v2237 = vsub.s32 %v2234, %v2236
        %v2238 = vrot.slane %v2230, %v2237
        %v2240 = vunpack.c.l.s4 1934713408
        %v2241 = vunpack.c.0.s8 %v2240
        %v2242 = vlaneseq
        %v2243 = vshrl.u32 %v2242, 7
        %v2244 = vsub.s32 %v2241, %v2243
        %v2245 = vrot.slane %v2231, %v2244
        %v2246 = vcombine.low %v2190, %v2222
        %v2247 = vcombine.high %v2190, %v2222
        %v2248 = vcombine.low %v2197, %v2229
        %v2249 = vcombine.high %v2197, %v2229
        %v2250 = vcombine.low %v2206, %v2238
        %v2251 = vcombine.high %v2206, %v2238
        %v2252 = vcombine.low %v2213, %v2245
        %v2253 = vcombine.high %v2213, %v2245
        %v2254 = vcombine.low %v2079, %v2087
        %v2255 = vcombine.high %v2079, %v2087
        %v2257 = vunpack.c.l.s4 1983009808
        %v2258 = vunpack.c.0.s8 %v2257
        %v2259 = vlaneseq
        %v2260 = vshrl.u32 %v2259, 7
        %v2261 = vsub.s32 %v2258, %v2260
        %v2262 = vrot.slane %v2254, %v2261
        %v2264 = vunpack.c.l.s4 1983009808
        %v2265 = vunpack.c.0.s8 %v2264
        %v2266 = vlaneseq
        %v2267 = vshrl.u32 %v2266, 7
        %v2268 = vsub.s32 %v2265, %v2267
        %v2269 = vrot.slane %v2255, %v2268
        %v2270 = vcombine.low %v2083, %v2091
        %v2271 = vcombine.high %v2083, %v2091
        %v2273 = vunpack.c.l.s4 1983009808
        %v2274 = vunpack.c.0.s8 %v2273
        %v2275 = vlaneseq
        %v2276 = vshrl.u32 %v2275, 7
        %v2277 = vsub.s32 %v2274, %v2276
        %v2278 = vrot.slane %v2270, %v2277
        %v2280 = vunpack.c.l.s4 1983009808
        %v2281 = vunpack.c.0.s8 %v2280
        %v2282 = vlaneseq
        %v2283 = vshrl.u32 %v2282, 7
        %v2284 = vsub.s32 %v2281, %v2283
        %v2285 = vrot.slane %v2271, %v2284
        %v2286 = vcombine.low %v2262, %v2278
        %v2287 = vcombine.high %v2262, %v2278
        %v2289 = vunpack.c.l.s4 1934713408
        %v2290 = vunpack.c.0.s8 %v2289
        %v2291 = vlaneseq
        %v2292 = vshrl.u32 %v2291, 7
        %v2293 = vsub.s32 %v2290, %v2292
        %v2294 = vrot.slane %v2286, %v2293
        %v2296 = vunpack.c.l.s4 1934713408
        %v2297 = vunpack.c.0.s8 %v2296
        %v2298 = vlaneseq
        %v2299 = vshrl.u32 %v2298, 7
        %v2300 = vsub.s32 %v2297, %v2299
        %v2301 = vrot.slane %v2287, %v2300
        %v2302 = vcombine.low %v2269, %v2285
        %v2303 = vcombine.high %v2269, %v2285
        %v2305 = vunpack.c.l.s4 1934713408
        %v2306 = vunpack.c.0.s8 %v2305
        %v2307 = vlaneseq
        %v2308 = vshrl.u32 %v2307, 7
        %v2309 = vsub.s32 %v2306, %v2308
        %v2310 = vrot.slane %v2302, %v2309
        %v2312 = vunpack.c.l.s4 1934713408
        %v2313 = vunpack.c.0.s8 %v2312
        %v2314 = vlaneseq
        %v2315 = vshrl.u32 %v2314, 7
        %v2316 = vsub.s32 %v2313, %v2315
        %v2317 = vrot.slane %v2303, %v2316
        %v2318 = vcombine.high %v2294, 0.0
        %v2319 = vcombine.high %v2301, 0.0
        %v2320 = vcombine.high %v2310, 0.0
        %v2321 = vcombine.high %v2317, 0.0
        %v2322 = vcombine.low %v2049, %v2057
        %v2323 = vcombine.high %v2049, %v2057
        %v2325 = vunpack.c.l.s4 1983009808
        %v2326 = vunpack.c.0.s8 %v2325
        %v2327 = vlaneseq
        %v2328 = vshrl.u32 %v2327, 7
        %v2329 = vsub.s32 %v2326, %v2328
        %v2330 = vrot.slane %v2322, %v2329
        %v2332 = vunpack.c.l.s4 1983009808
        %v2333 = vunpack.c.0.s8 %v2332
        %v2334 = vlaneseq
        %v2335 = vshrl.u32 %v2334, 7
        %v2336 = vsub.s32 %v2333, %v2335
        %v2337 = vrot.slane %v2323, %v2336
        %v2338 = vcombine.low %v2053, %v2061
        %v2339 = vcombine.high %v2053, %v2061
        %v2341 = vunpack.c.l.s4 1983009808
        %v2342 = vunpack.c.0.s8 %v2341
        %v2343 = vlaneseq
        %v2344 = vshrl.u32 %v2343, 7
        %v2345 = vsub.s32 %v2342, %v2344
        %v2346 = vrot.slane %v2338, %v2345
        %v2348 = vunpack.c.l.s4 1983009808
        %v2349 = vunpack.c.0.s8 %v2348
        %v2350 = vlaneseq
        %v2351 = vshrl.u32 %v2350, 7
        %v2352 = vsub.s32 %v2349, %v2351
        %v2353 = vrot.slane %v2339, %v2352
        %v2354 = vcombine.low %v2065, %v2073
        %v2355 = vcombine.high %v2065, %v2073
        %v2357 = vunpack.c.l.s4 1983009808
        %v2358 = vunpack.c.0.s8 %v2357
        %v2359 = vlaneseq
        %v2360 = vshrl.u32 %v2359, 7
        %v2361 = vsub.s32 %v2358, %v2360
        %v2362 = vrot.slane %v2354, %v2361
        %v2364 = vunpack.c.l.s4 1983009808
        %v2365 = vunpack.c.0.s8 %v2364
        %v2366 = vlaneseq
        %v2367 = vshrl.u32 %v2366, 7
        %v2368 = vsub.s32 %v2365, %v2367
        %v2369 = vrot.slane %v2355, %v2368
        %v2370 = vcombine.low %v2069, %v2077
        %v2371 = vcombine.high %v2069, %v2077
        %v2373 = vunpack.c.l.s4 1983009808
        %v2374 = vunpack.c.0.s8 %v2373
        %v2375 = vlaneseq
        %v2376 = vshrl.u32 %v2375, 7
        %v2377 = vsub.s32 %v2374, %v2376
        %v2378 = vrot.slane %v2370, %v2377
        %v2380 = vunpack.c.l.s4 1983009808
        %v2381 = vunpack.c.0.s8 %v2380
        %v2382 = vlaneseq
        %v2383 = vshrl.u32 %v2382, 7
        %v2384 = vsub.s32 %v2381, %v2383
        %v2385 = vrot.slane %v2371, %v2384
        %v2386 = vcombine.low %v2330, %v2346
        %v2387 = vcombine.high %v2330, %v2346
        %v2389 = vunpack.c.l.s4 1934713408
        %v2390 = vunpack.c.0.s8 %v2389
        %v2391 = vlaneseq
        %v2392 = vshrl.u32 %v2391, 7
        %v2393 = vsub.s32 %v2390, %v2392
        %v2394 = vrot.slane %v2386, %v2393
        %v2396 = vunpack.c.l.s4 1934713408
        %v2397 = vunpack.c.0.s8 %v2396
        %v2398 = vlaneseq
        %v2399 = vshrl.u32 %v2398, 7
        %v2400 = vsub.s32 %v2397, %v2399
        %v2401 = vrot.slane %v2387, %v2400
        %v2402 = vcombine.low %v2337, %v2353
        %v2403 = vcombine.high %v2337, %v2353
        %v2405 = vunpack.c.l.s4 1934713408
        %v2406 = vunpack.c.0.s8 %v2405
        %v2407 = vlaneseq
        %v2408 = vshrl.u32 %v2407, 7
        %v2409 = vsub.s32 %v2406, %v2408
        %v2410 = vrot.slane %v2402, %v2409
        %v2412 = vunpack.c.l.s4 1934713408
        %v2413 = vunpack.c.0.s8 %v2412
        %v2414 = vlaneseq
        %v2415 = vshrl.u32 %v2414, 7
        %v2416 = vsub.s32 %v2413, %v2415
        %v2417 = vrot.slane %v2403, %v2416
        %v2418 = vcombine.low %v2362, %v2378
        %v2419 = vcombine.high %v2362, %v2378
        %v2421 = vunpack.c.l.s4 1934713408
        %v2422 = vunpack.c.0.s8 %v2421
        %v2423 = vlaneseq
        %v2424 = vshrl.u32 %v2423, 7
        %v2425 = vsub.s32 %v2422, %v2424
        %v2426 = vrot.slane %v2418, %v2425
        %v2428 = vunpack.c.l.s4 1934713408
        %v2429 = vunpack.c.0.s8 %v2428
        %v2430 = vlaneseq
        %v2431 = vshrl.u32 %v2430, 7
        %v2432 = vsub.s32 %v2429, %v2431
        %v2433 = vrot.slane %v2419, %v2432
        %v2434 = vcombine.low %v2369, %v2385
        %v2435 = vcombine.high %v2369, %v2385
        %v2437 = vunpack.c.l.s4 1934713408
        %v2438 = vunpack.c.0.s8 %v2437
        %v2439 = vlaneseq
        %v2440 = vshrl.u32 %v2439, 7
        %v2441 = vsub.s32 %v2438, %v2440
        %v2442 = vrot.slane %v2434, %v2441
        %v2444 = vunpack.c.l.s4 1934713408
        %v2445 = vunpack.c.0.s8 %v2444
        %v2446 = vlaneseq
        %v2447 = vshrl.u32 %v2446, 7
        %v2448 = vsub.s32 %v2445, %v2447
        %v2449 = vrot.slane %v2435, %v2448
        %v2450 = vcombine.low %v2394, %v2426
        %v2451 = vcombine.high %v2394, %v2426
        %v2452 = vcombine.low %v2401, %v2433
        %v2453 = vcombine.high %v2401, %v2433
        %v2454 = vcombine.low %v2410, %v2442
        %v2455 = vcombine.high %v2410, %v2442
        %v2456 = vcombine.low %v2417, %v2449
        %v2457 = vcombine.high %v2417, %v2449
        %v2458 = vcombine.low %v2081, %v2089
        %v2459 = vcombine.high %v2081, %v2089
        %v2461 = vunpack.c.l.s4 1983009808
        %v2462 = vunpack.c.0.s8 %v2461
        %v2463 = vlaneseq
        %v2464 = vshrl.u32 %v2463, 7
        %v2465 = vsub.s32 %v2462, %v2464
        %v2466 = vrot.slane %v2458, %v2465
        %v2468 = vunpack.c.l.s4 1983009808
        %v2469 = vunpack.c.0.s8 %v2468
        %v2470 = vlaneseq
        %v2471 = vshrl.u32 %v2470, 7
        %v2472 = vsub.s32 %v2469, %v2471
        %v2473 = vrot.slane %v2459, %v2472
        %v2474 = vcombine.low %v2085, %v2093
        %v2475 = vcombine.high %v2085, %v2093
        %v2477 = vunpack.c.l.s4 1983009808
        %v2478 = vunpack.c.0.s8 %v2477
        %v2479 = vlaneseq
        %v2480 = vshrl.u32 %v2479, 7
        %v2481 = vsub.s32 %v2478, %v2480
        %v2482 = vrot.slane %v2474, %v2481
        %v2484 = vunpack.c.l.s4 1983009808
        %v2485 = vunpack.c.0.s8 %v2484
        %v2486 = vlaneseq
        %v2487 = vshrl.u32 %v2486, 7
        %v2488 = vsub.s32 %v2485, %v2487
        %v2489 = vrot.slane %v2475, %v2488
        %v2490 = vcombine.low %v2466, %v2482
        %v2491 = vcombine.high %v2466, %v2482
        %v2493 = vunpack.c.l.s4 1934713408
        %v2494 = vunpack.c.0.s8 %v2493
        %v2495 = vlaneseq
        %v2496 = vshrl.u32 %v2495, 7
        %v2497 = vsub.s32 %v2494, %v2496
        %v2498 = vrot.slane %v2490, %v2497
        %v2500 = vunpack.c.l.s4 1934713408
        %v2501 = vunpack.c.0.s8 %v2500
        %v2502 = vlaneseq
        %v2503 = vshrl.u32 %v2502, 7
        %v2504 = vsub.s32 %v2501, %v2503
        %v2505 = vrot.slane %v2491, %v2504
        %v2506 = vcombine.low %v2473, %v2489
        %v2507 = vcombine.high %v2473, %v2489
        %v2509 = vunpack.c.l.s4 1934713408
        %v2510 = vunpack.c.0.s8 %v2509
        %v2511 = vlaneseq
        %v2512 = vshrl.u32 %v2511, 7
        %v2513 = vsub.s32 %v2510, %v2512
        %v2514 = vrot.slane %v2506, %v2513
        %v2516 = vunpack.c.l.s4 1934713408
        %v2517 = vunpack.c.0.s8 %v2516
        %v2518 = vlaneseq
        %v2519 = vshrl.u32 %v2518, 7
        %v2520 = vsub.s32 %v2517, %v2519
        %v2521 = vrot.slane %v2507, %v2520
        %v2522 = vcombine.high %v2498, 0.0
        %v2523 = vcombine.high %v2505, 0.0
        %v2524 = vcombine.high %v2514, 0.0
        %v2525 = vcombine.high %v2521, 0.0
        %2528 = vrot.lane.b32.xlu0 %v2247, 16
        %v2529 = vpop.permute.xlu0 %2528
        %2530 = vrot.lane.b32.xlu0 %v2318, 16
        %v2531 = vpop.permute.xlu0 %2530
        %2536 = vrot.lane.b32.xlu0 %v2248, 32
        %v2537 = vpop.permute.xlu0 %2536
        %2538 = vrot.lane.b32.xlu0 %v2301, 32
        %v2539 = vpop.permute.xlu0 %2538
        %2544 = vrot.lane.b32.xlu0 %v2249, 48
        %v2545 = vpop.permute.xlu0 %2544
        %2546 = vrot.lane.b32.xlu0 %v2319, 48
        %v2547 = vpop.permute.xlu0 %2546
        %2552 = vrot.lane.b32.xlu0 %v2250, 64
        %v2553 = vpop.permute.xlu0 %2552
        %2554 = vrot.lane.b32.xlu0 %v2310, 64
        %v2555 = vpop.permute.xlu0 %2554
        %2560 = vrot.lane.b32.xlu0 %v2251, 80
        %v2561 = vpop.permute.xlu0 %2560
        %2562 = vrot.lane.b32.xlu0 %v2320, 80
        %v2563 = vpop.permute.xlu0 %2562
        %2568 = vrot.lane.b32.xlu0 %v2252, 96
        %v2569 = vpop.permute.xlu0 %2568
        %2570 = vrot.lane.b32.xlu0 %v2317, 96
        %v2571 = vpop.permute.xlu0 %2570
        %2576 = vrot.lane.b32.xlu0 %v2253, 112
        %v2577 = vpop.permute.xlu0 %2576
        %2578 = vrot.lane.b32.xlu0 %v2321, 112
        %v2579 = vpop.permute.xlu0 %2578
        %2584 = vrot.lane.b32.xlu0 %v2451, 16
        %v2585 = vpop.permute.xlu0 %2584
        %2586 = vrot.lane.b32.xlu0 %v2522, 16
        %v2587 = vpop.permute.xlu0 %2586
        %2592 = vrot.lane.b32.xlu0 %v2452, 32
        %v2593 = vpop.permute.xlu0 %2592
        %2594 = vrot.lane.b32.xlu0 %v2505, 32
        %v2595 = vpop.permute.xlu0 %2594
        %2600 = vrot.lane.b32.xlu0 %v2453, 48
        %v2601 = vpop.permute.xlu0 %2600
        %2602 = vrot.lane.b32.xlu0 %v2523, 48
        %v2603 = vpop.permute.xlu0 %2602
        %2608 = vrot.lane.b32.xlu0 %v2454, 64
        %v2609 = vpop.permute.xlu0 %2608
        %2610 = vrot.lane.b32.xlu0 %v2514, 64
        %v2611 = vpop.permute.xlu0 %2610
        %2616 = vrot.lane.b32.xlu0 %v2455, 80
        %v2617 = vpop.permute.xlu0 %2616
        %2618 = vrot.lane.b32.xlu0 %v2524, 80
        %v2619 = vpop.permute.xlu0 %2618
        %2624 = vrot.lane.b32.xlu0 %v2456, 96
        %v2625 = vpop.permute.xlu0 %2624
        %2626 = vrot.lane.b32.xlu0 %v2521, 96
        %v2627 = vpop.permute.xlu0 %2626
        %2632 = vrot.lane.b32.xlu0 %v2457, 112
        %v2633 = vpop.permute.xlu0 %2632
        %2634 = vrot.lane.b32.xlu0 %v2525, 112
        %v2635 = vpop.permute.xlu0 %2634
        %vm2638 = vcmask 130048
        %v2639 = vsel %vm2638, %v2246, %v2529
        %v2640 = vsel %vm2638, %v2294, %v2531
        %vm2641 = vcmask 261120
        %v2642 = vsel %vm2641, %v2639, %v2537
        %v2643 = vsel %vm2641, %v2640, %v2539
        %vm2644 = vcmask 392192
        %v2645 = vsel %vm2644, %v2642, %v2545
        %v2646 = vsel %vm2644, %v2643, %v2547
        %vm2647 = vcmask 523264
        %v2648 = vsel %vm2647, %v2645, %v2553
        %v2649 = vsel %vm2647, %v2646, %v2555
        %vm2650 = vcmask 654336
        %v2651 = vsel %vm2650, %v2648, %v2561
        %v2652 = vsel %vm2650, %v2649, %v2563
        %vm2653 = vcmask 785408
        %v2654 = vsel %vm2653, %v2651, %v2569
        %v2655 = vsel %vm2653, %v2652, %v2571
        %vm2656 = vcmask 916480
        %v2657 = vsel %vm2656, %v2654, %v2577
        %v2658 = vsel %vm2656, %v2655, %v2579
        %v2659 = vsel %vm2638, %v2450, %v2585
        %v2660 = vsel %vm2638, %v2498, %v2587
        %v2661 = vsel %vm2641, %v2659, %v2593
        %v2662 = vsel %vm2641, %v2660, %v2595
        %v2663 = vsel %vm2644, %v2661, %v2601
        %v2664 = vsel %vm2644, %v2662, %v2603
        %v2665 = vsel %vm2647, %v2663, %v2609
        %v2666 = vsel %vm2647, %v2664, %v2611
        %v2667 = vsel %vm2650, %v2665, %v2617
        %v2668 = vsel %vm2650, %v2666, %v2619
        %v2669 = vsel %vm2653, %v2667, %v2625
        %v2670 = vsel %vm2653, %v2668, %v2627
        %v2671 = vsel %vm2656, %v2669, %v2633
        %v2672 = vsel %vm2656, %v2670, %v2635
        %v2673 = vld [vmem:[%s1] sm:$0xff]
        %v2674 = vld [vmem:[%s2] sm:$0xff]
        %2676 = vset.pattern.permute.xlu0 0
        %2677 = vperm.xlu0 %2676, %v2674
        %v2678 = vpop.permute.xlu0 %2677
        %vm2680 = vcmask 97280
        %v2682 = vsel %vm2680, %v2673, 0
        %v2685 = vsel %vm1556, %v2658, 0
        %v2688 = vsel %vm1556, %v2672, 0
        %2690 = vmatprep.subr.mxu0 %v2671
        %2691 = vmatpush1.msra.mxu0 %v2657
        %2692 = vmatprep.subr.mxu0 %v2688
        %2693 = vmatpush1.msra.mxu0 %v2685
        %2694 = vmatprep.subr.mxu0 0.0
        %2695 = vmatpush1.msra.mxu0 0.0
        %2696 = vmatprep.subr.mxu0 0.0
        %2697 = vmatpush1.msra.mxu0 0.0
        %2698 = vmatprep.subr.mxu0 0.0
        %2699 = vmatpush1.msra.mxu0 0.0
        %2700 = vmatprep.subr.mxu0 0.0
        %2701 = vmatpush1.msra.mxu0 0.0
        %2702 = vmatprep.subr.mxu0 0.0
        %2703 = vmatpush1.msra.mxu0 0.0
        %2704 = vmatprep.subr.mxu0 0.0
        %2705 = vmatpush1.msra.mxu0 0.0
        %2706 = vmatprep.subr.mxu0 0.0
        %2707 = vmatpush1.msra.mxu0 0.0
        %2708 = vmatprep.subr.mxu0 0.0
        %2709 = vmatpush1.msra.mxu0 0.0
        %2710 = vmatprep.subr.mxu0 0.0
        %2711 = vmatpush1.msra.mxu0 0.0
        %2712 = vmatprep.subr.mxu0 0.0
        %2713 = vmatpush1.msra.mxu0 0.0
        %2714 = vmatprep.subr.mxu0 0.0
        %2715 = vmatpush1.msra.mxu0 0.0
        %2716 = vmatprep.subr.mxu0 0.0
        %2717 = vmatpush1.msra.mxu0 0.0
        %2718 = vmatprep.subr.mxu0 0.0
        %2719 = vmatpush1.msra.mxu0 0.0
        %2720 = vmatprep.subr.mxu0 0.0
        %2721 = vmatpush1.msra.mxu0 0.0
        %2722 = vmatprep.subr.mxu0 0.0
        %2723 = vmatpush1.msra.mxu0 0.0
        %2724 = vmatprep.subr.mxu0 0.0
        %2725 = vmatpush1.msra.mxu0 0.0
        %2726 = vmatprep.subr.mxu0 0.0
        %2727 = vmatpush1.msra.mxu0 0.0
        %2728 = vmatprep.subr.mxu0 0.0
        %2729 = vmatpush1.msra.mxu0 0.0
        %2730 = vmatprep.subr.mxu0 0.0
        %2731 = vmatpush1.msra.mxu0 0.0
        %2732 = vmatprep.subr.mxu0 0.0
        %2733 = vmatpush1.msra.mxu0 0.0
        %2734 = vmatprep.subr.mxu0 0.0
        %2735 = vmatpush1.msra.mxu0 0.0
        %2736 = vmatprep.subr.mxu0 0.0
        %2737 = vmatpush1.msra.mxu0 0.0
        %2738 = vmatprep.subr.mxu0 0.0
        %2739 = vmatpush1.msra.mxu0 0.0
        %2740 = vmatprep.subr.mxu0 0.0
        %2741 = vmatpush1.msra.mxu0 0.0
        %2742 = vmatprep.subr.mxu0 0.0
        %2743 = vmatpush1.msra.mxu0 0.0
        %2744 = vmatprep.subr.mxu0 0.0
        %2745 = vmatpush1.msra.mxu0 0.0
        %2746 = vmatprep.subr.mxu0 0.0
        %2747 = vmatpush1.msra.mxu0 0.0
        %2748 = vmatprep.subr.mxu0 0.0
        %2749 = vmatpush1.msra.mxu0 0.0
        %2750 = vmatprep.subr.mxu0 0.0
        %2751 = vmatpush1.msra.mxu0 0.0
        %2752 = vmatprep.subr.mxu0 0.0
        %2753 = vmatpush1.msra.mxu0 0.0
        %2754 = vmatprep.mubr.f32.mxu0 0.0
        %2755 = vmatmul.mubr.f32.gmra.mrb[0].mxu0 %v2682
        %v2756 = vpop.f32.mrb[0].mxu0
        %v2757 = vadd.f32 %v2678, %v2756
        %v2758 = vpop.f32.mrb[0].mxu0
        %v2759 = vadd.f32 %v2678, %v2758
        %2760 = vdwg.mxu0
        %v2761 = vmax.f32 %v2757, 0.0
        %v2762 = vmax.f32 %v2759, 0.0
        %2763 = vst [vmem:[%s163] sm:$0xff] %v2761
        %2764 = vst [vmem:[%s163 + $0x8] sm:$0xff] %v2762
        %s2765 = sand.u32 %s93, 1
        %s2766 = scalar_lea.sflag [#allocation3], %s2765
        %s2767 = sand.u32 %s93, 1
        %s2768 = smul.addr %s2767, 16
        %s2769 = scalar_lea.vmem [#allocation2], %s2768
        // Predicated region
        $region33: #{tpu_custom_call.1} parent=31 // pred_check
          %p2770 = pneg %p103
        $region34: #{tpu_custom_call.1} parent=31 // pred_check_branch
          %2772 = sbr.rel (%p2770) target = $region36
        $region35: #{tpu_custom_call.1} parent=31 // pred_region
          %s2774 = ssub.s32 256, 256
          %2775 = vsyncadd %s2766, %s2774
          %s2776 = smul.addr %s17, 2
          %s2777 = smul.addr %s2776, 128
          %s2778 = scalar_lea.hbm %s3, %s2777
          %s2780 = sshll.u32 %s2769, 4
          %s2781 = int_to_ptr.vmem [resolvable:$true] %s2780
          %2783 = dma.vmem_to_hbm [thread:$0]  %s2781, 256, %s2778, %s2766
        $region36: #{tpu_custom_call.1} parent=31 // pred_fallthru
          _
      $region32: #{tpu_custom_call.1} parent=5 // pred_fallthru
        _
      %p2784 = scmp.le.s32.totalorder 2, %s12
      // Predicated region
      $region37: #{tpu_custom_call.1} parent=5 // pred_check
        %p2785 = pneg %p2784
      $region38: #{tpu_custom_call.1} parent=5 // pred_check_branch
        %2787 = sbr.rel (%p2785) target = $region40
      $region39: #{tpu_custom_call.1} parent=5 // pred_region
        %s2788 = ssub.s32 %s12, 2
        // Predicated region
        $region41: #{tpu_custom_call.1} parent=39 // pred_check
          %p2789 = pneg %p109
        $region42: #{tpu_custom_call.1} parent=39 // pred_check_branch
          %2791 = sbr.rel (%p2789) target = $region44
        $region43: #{tpu_custom_call.1} parent=39 // pred_region
          %s2792 = sand.u32 %s94, 1
          %s2793 = scalar_lea.sflag [#allocation3], %s2792
          %s2794 = sand.u32 %s94, 1
          %s2795 = smul.addr %s2794, 16
          %s2796 = scalar_lea.vmem [#allocation2], %s2795
          %2797 = dma.done %s2793, 256
        $region44: #{tpu_custom_call.1} parent=39 // pred_fallthru
          _
      $region40: #{tpu_custom_call.1} parent=5 // pred_fallthru
        _
    $region6: #{tpu_custom_call.1} parent=1 // loop_footer
      %s16 = sadd.s32 1, %s12
    $region7: #{tpu_custom_call.1} parent=1 // loop_footer_branch
      %11 = sbr.rel target = $region3
    $region8: #{tpu_custom_call.1} parent=1 // loop_exit
      _
    %2798 = vsyncpa [#allocation3], 1
    %s2799 = scalar_lea.sflag [#allocation3], 1
    %2800 = vsyncpa %s2799, 1

</llo_original>
